<compile_context>
chip_gen: v7x
topology: tpu7x:2x2x1
jax: 0.10.0
libtpu: 0.0.40
codegen_flags: <defaults>
</compile_context>

<pallas_src>
import functools

import jax
import jax.numpy as jnp
from jax.experimental import pallas as pl
from jax.experimental.pallas import tpu as pltpu


# ----------------------------------------------------------------------------
# Pallas kernel
# ----------------------------------------------------------------------------
def _distill_kernel(cls_l_ref, cls_f_ref, reg_l_ref, reg_f_ref,
                    cx_ref, cy_ref, rad_ref, nis_ref, val_ref,
                    out_ref, mask_ref, *, n_boxes, n_hi, tile_h):
    b = pl.program_id(0)
    ho = pl.program_id(1)
    hi = pl.program_id(2)
    h_idx = ho * n_hi + hi                       # absolute H-tile index

    NEG = jnp.float32(-1e30)
    tH = tile_h
    W = mask_ref.shape[1]

    # Separable pixel coordinates for this tile (no full (tH, W) coordinate vregs).
    xs = jax.lax.broadcasted_iota(jnp.int32, (1, W), 1).astype(jnp.float32)        # cols
    ys = (jax.lax.broadcasted_iota(jnp.int32, (tH, 1), 0)
          + h_idx * tile_h).astype(jnp.float32)                                    # rows
    y_lo = (h_idx * tile_h).astype(jnp.float32)
    y_hi = y_lo + jnp.float32(tile_h - 1)

    # --- gaussian foreground mask (umich gaussian, max-merged over boxes) ------
    mask_ref[...] = jnp.full((tH, W), NEG, jnp.float32)

    def box_body(n, carry):
        cx = cx_ref[b, n]
        cy = cy_ref[b, n]
        r = rad_ref[b, n]
        nis = nis_ref[b, n]                      # -0.5 / sigma^2 (precomputed)
        vd = val_ref[b, n]
        # cull: invalid box, or box y-extent does not touch this H tile
        hit = (vd > 0.0) & (cy + r >= y_lo) & (cy - r <= y_hi)

        @pl.when(hit)
        def _():
            dx = xs - cx                                                   # (1, W)
            rx = jnp.where(jnp.abs(dx) <= r, dx * dx * nis, NEG)
            dy = ys - cy                                                   # (tH, 1)
            ry = jnp.where(jnp.abs(dy) <= r, dy * dy * nis, NEG)
            # one broadcast add + one max over the full tile per box
            mask_ref[...] = jnp.maximum(mask_ref[...], rx + ry)

        return carry

    if n_boxes > 0:
        jax.lax.fori_loop(0, n_boxes, box_body, 0)

    # single exp per pixel (exp is monotone; penalized args underflow to 0)
    arg = mask_ref[...]
    mask_ref[...] = jnp.where(arg > 0.5 * NEG, jnp.exp(arg), 0.0)

    # --- regression branch (SmoothL1 beta=1, channel mean) ---------------------
    d = reg_l_ref[0].astype(jnp.float32) - reg_f_ref[0].astype(jnp.float32)
    ad = jnp.abs(d)
    sl1 = jnp.where(ad < 1.0, 0.5 * d * d, ad - 0.5)
    diff_reg = jnp.mean(sl1, axis=0)                                       # (tH, W)
    reg_sum = jnp.sum(diff_reg * mask_ref[...])

    # --- classification branch (L1 on channel max; sigmoid hoisted past max) ---
    cls_l_max = jnp.max(cls_l_ref[0], axis=0).astype(jnp.float32)
    cls_f_max = jax.nn.sigmoid(jnp.max(cls_f_ref[0], axis=0).astype(jnp.float32) * 0.5)
    diff_cls = jnp.abs(cls_l_max - cls_f_max)
    cls_sum = jnp.sum(diff_cls * mask_ref[...])

    m_sum = jnp.sum(mask_ref[...])

    # --- pack the three scalar sums into lanes 0/1/2 of the resident output ----
    lane = jax.lax.broadcasted_iota(jnp.int32, (1, 1, 128), 2)
    packed = jnp.where(lane == 0, reg_sum,
             jnp.where(lane == 1, cls_sum,
             jnp.where(lane == 2, m_sum, 0.0)))

    @pl.when(hi == 0)
    def _():
        out_ref[...] = jnp.zeros_like(out_ref)

    out_ref[...] += packed


# ----------------------------------------------------------------------------
# VMEM budgeting (generation-aware)
# ----------------------------------------------------------------------------
def _vmem_limit_bytes():
    cap = 64 << 20                                    # conservative fallback (v7x-sized)
    try:
        info = pltpu.get_tpu_info()
        cap = int(getattr(info, "vmem_capacity_bytes", cap))
    except Exception:
        pass
    # ~96 MiB on 128 MiB chips (v5e/v6e), ~48 MiB on 64 MiB chips (v7x)
    return min(cap * 3 // 4, 100 << 20)


def _choose_tile_h(H, W, c_cls, c_reg, in_bytes, vmem_limit):
    """Largest H tile (aligned, divides H) keeping the double-buffered feature
    inputs plus the in-kernel f32 temporaries under the VMEM limit."""
    per_row_in = 2 * 2 * (c_cls + c_reg) * W * in_bytes      # 4 inputs x 2 buffers
    per_row_tmp = (3 * c_reg + 2 * c_cls + 8) * W * 4        # d/ad/sl1, cls temps, mask
    per_row = per_row_in + per_row_tmp
    budget = max(int(vmem_limit) - (8 << 20), 4 << 20)
    step = 16 if in_bytes == 2 else 8                        # bf16 sublane packing
    cands = [t for t in range(step, H + 1, step) if H % t == 0]
    if not cands:
        return H
    fitting = [t for t in cands if t * per_row <= budget]
    return max(fitting) if fitting else min(cands)


# ----------------------------------------------------------------------------
# Wrapper
# ----------------------------------------------------------------------------
def dc_result_distill_pallas(cls_lidar, cls_fuse_raw, reg_lidar, reg_fuse,
                             box_cx, box_cy, box_rad, box_sig, box_valid,
                             loss_weight_reg=10.0, loss_weight_cls=10.0,
                             ret_sum=False, tile_h=None, h_outer=None):
    B, C_cls, H, W = cls_lidar.shape
    C_reg = reg_lidar.shape[1]
    N = box_cx.shape[1]

    in_bytes = jnp.dtype(cls_lidar.dtype).itemsize
    vmem_limit = _vmem_limit_bytes()
    if tile_h is None:
        tile_h = _choose_tile_h(H, W, C_cls, C_reg, in_bytes, vmem_limit)
    assert H % tile_h == 0 and (tile_h == H or tile_h % 8 == 0), (H, tile_h)

    n_h = H // tile_h
    if h_outer is None:
        # second parallel axis so both v7x TensorCores are busy when B == 1
        h_outer = 2 if (B == 1 and n_h % 2 == 0) else 1
    assert n_h % h_outer == 0, (n_h, h_outer)
    n_hi = n_h // h_outer

    # hoist the per-box divide out of the kernel
    box_sig = box_sig.astype(jnp.float32)
    neg_inv_2sig2 = -0.5 / (box_sig * box_sig)
    box_cx = box_cx.astype(jnp.float32)
    box_cy = box_cy.astype(jnp.float32)
    box_rad = box_rad.astype(jnp.float32)
    box_valid = box_valid.astype(jnp.float32)

    feat_spec = lambda c: pl.BlockSpec(
        (1, c, tile_h, W), lambda b, ho, hi: (b, 0, ho * n_hi + hi, 0))
    smem_spec = pl.BlockSpec(memory_space=pltpu.MemorySpace.SMEM)
    out_spec = pl.BlockSpec((1, 1, 128), lambda b, ho, hi: (b * h_outer + ho, 0, 0))

    kernel = functools.partial(_distill_kernel, n_boxes=N, n_hi=n_hi, tile_h=tile_h)

    sums = pl.pallas_call(
        kernel,
        grid=(B, h_outer, n_hi),
        in_specs=[feat_spec(C_cls), feat_spec(C_cls), feat_spec(C_reg), feat_spec(C_reg),
                  smem_spec, smem_spec, smem_spec, smem_spec, smem_spec],
        out_specs=out_spec,
        out_shape=jax.ShapeDtypeStruct((B * h_outer, 1, 128), jnp.float32),
        scratch_shapes=[pltpu.VMEM((tile_h, W), jnp.float32)],
        compiler_params=pltpu.CompilerParams(
            dimension_semantics=("parallel", "parallel", "arbitrary"),
            vmem_limit_bytes=int(vmem_limit)),
    )(cls_lidar, cls_fuse_raw, reg_lidar, reg_fuse,
      box_cx, box_cy, box_rad, neg_inv_2sig2, box_valid)

    reg_sum = jnp.sum(sums[:, 0, 0])
    cls_sum = jnp.sum(sums[:, 0, 1])
    weight = jnp.sum(sums[:, 0, 2])        # world_size == 1 => reduce_mean == identity
    loss_reg = reg_sum / (weight + 0.0001)
    loss_cls = cls_sum / (weight + 0.0001)
    if ret_sum:
        # TODO(synk): original module references undefined self.loss_weight here;
        # we reuse loss_weight_reg.
        return loss_weight_reg * (loss_reg + loss_cls)
    return loss_weight_reg * loss_reg, loss_weight_cls * loss_cls


# ----------------------------------------------------------------------------
# Glue: gaussian-mask box parameters (pixel center / radius / sigma / valid)
# ----------------------------------------------------------------------------
def _gaussian_radius(height, width, min_overlap=0.1):
    b1 = height + width
    c1 = width * height * (1.0 - min_overlap) / (1.0 + min_overlap)
    r1 = (b1 + jnp.sqrt(b1 * b1 - 4.0 * c1)) / 2.0
    b2 = 2.0 * (height + width)
    c2 = (1.0 - min_overlap) * width * height
    r2 = (b2 + jnp.sqrt(b2 * b2 - 16.0 * c2)) / 2.0
    b3 = -2.0 * min_overlap * (height + width)
    c3 = (min_overlap - 1.0) * width * height
    r3 = (b3 + jnp.sqrt(b3 * b3 - 16.0 * min_overlap * c3)) / 2.0
    return jnp.minimum(jnp.minimum(r1, r2), r3)


def make_box_params(gt_boxes, pc_range, voxel_size, out_size_scale):
    # gt_boxes: (B, N, 9) = [cx, cy, cz, dx, dy, dz, yaw, vx, vy]  (gravity center)
    vx = voxel_size[0] * out_size_scale
    vy = voxel_size[1] * out_size_scale
    w_pix = gt_boxes[..., 3] / vx
    h_pix = gt_boxes[..., 4] / vy
    radius = _gaussian_radius(h_pix, w_pix, min_overlap=0.1)
    radius = jnp.maximum(2.0, jnp.floor(radius))
    sigma = (2.0 * radius + 1.0) / 6.0
    cx = jnp.floor((gt_boxes[..., 0] - pc_range[0]) / vx)    # center_int
    cy = jnp.floor((gt_boxes[..., 1] - pc_range[1]) / vy)
    valid = (jnp.sum(jnp.abs(gt_boxes), axis=-1) > 0).astype(jnp.float32)
    return (cx.astype(jnp.float32), cy.astype(jnp.float32),
            radius.astype(jnp.float32), sigma.astype(jnp.float32), valid)


# ----------------------------------------------------------------------------
# Pure-JAX reference (same math) for a correctness check
# ----------------------------------------------------------------------------
def _reference(cls_lidar, cls_fuse_raw, reg_lidar, reg_fuse, cx, cy, rad, sig, val,
               lw_reg=10.0, lw_cls=10.0):
    B, _, H, W = cls_lidar.shape
    cls_f = jax.nn.sigmoid(cls_fuse_raw / 2.0)
    diff_cls = jnp.abs(cls_lidar.max(1) - cls_f.max(1))
    d = reg_lidar - reg_fuse
    ad = jnp.abs(d)
    sl1 = jnp.where(ad < 1.0, 0.5 * d * d, ad - 0.5)
    diff_reg = sl1.mean(1)
    yy = jnp.arange(H, dtype=jnp.float32)[:, None]
    xx = jnp.arange(W, dtype=jnp.float32)[None, :]
    dx = xx[None, None] - cx[:, :, None, None]
    dy = yy[None, None] - cy[:, :, None, None]
    g = jnp.exp(-(dx ** 2 + dy ** 2) / (2.0 * sig[:, :, None, None] ** 2))
    inside = (jnp.abs(dx) <= rad[:, :, None, None]) & (jnp.abs(dy) <= rad[:, :, None, None])
    g = jnp.where(inside, g, 0.0) * val[:, :, None, None]
    mask = g.max(axis=1)
    weight = mask.sum()
    return (lw_reg * (diff_reg * mask).sum() / (weight + 0.0001),
            lw_cls * (diff_cls * mask).sum() / (weight + 0.0001))


# ----------------------------------------------------------------------------
# Demo
# ----------------------------------------------------------------------------
if __name__ == "__main__":
    B, H, W = 2, 32, 32
    out_size_scale = 8
    voxel_size = [0.1, 0.1, 0.2]
    pc_range = [-12.8, -12.8, -5.0, 12.8, 12.8, 3.0]     # -> 32x32 BEV grid
    task_num_cls = [2, 3]                                 # two CenterHead-style tasks
    reg_channels = [('reg', 2), ('height', 1), ('dim', 3), ('rot', 2), ('vel', 2)]

    keys = iter(jax.random.split(jax.random.PRNGKey(0), 64))

    def head(c):
        return jax.random.normal(next(keys), (B, c, H, W), jnp.float32)

    resp_lidar, resp_fuse = [], []
    for nc in task_num_cls:
        resp_lidar.append([{'heatmap': head(nc), **{k: head(c) for k, c in reg_channels}}])
        resp_fuse.append([{'heatmap': head(nc), **{k: head(c) for k, c in reg_channels}}])

    # glue: replicate the torch.cat plumbing of the module (NCHW, cat over dim=1)
    cls_lidar = jnp.concatenate([t[0]['heatmap'] for t in resp_lidar], axis=1)
    cls_fuse_raw = jnp.concatenate([t[0]['heatmap'] for t in resp_fuse], axis=1)
    cat_reg = lambda t: jnp.concatenate(
        [t[0]['reg'], t[0]['height'], t[0]['dim'], t[0]['rot'], t[0]['vel']], axis=1)
    reg_lidar = jnp.concatenate([cat_reg(t) for t in resp_lidar], axis=1)
    reg_fuse = jnp.concatenate([cat_reg(t) for t in resp_fuse], axis=1)

    # synthetic gt boxes (gravity-center format): (B, N, 9); last box of batch 1
    # is zero padding to exercise the validity-culling path.
    gt_boxes = jnp.array([
        [[-5.0,  3.0, 0.0, 4.0, 2.0, 1.6, 0.3, 0.5, 0.1],
         [ 2.5, -6.0, 0.2, 3.2, 1.8, 1.5, 1.1, 0.0, 0.0],
         [ 8.0,  8.0, 0.1, 6.0, 2.5, 2.0, 0.0, 1.0, 0.5]],
        [[ 0.0,  0.0, 0.0, 4.5, 2.1, 1.7, 0.7, 0.2, 0.3],
         [-9.0, -2.0, 0.3, 3.0, 1.6, 1.4, 2.0, 0.0, 0.0],
         [ 0.0,  0.0, 0.0, 0.0, 0.0, 0.0, 0.0, 0.0, 0.0]],
    ], dtype=jnp.float32)

    cx, cy, rad, sig, val = make_box_params(gt_boxes, pc_range, voxel_size, out_size_scale)

    ref_reg, ref_cls = _reference(
        cls_lidar, cls_fuse_raw, reg_lidar, reg_fuse, cx, cy, rad, sig, val)

    # 1) explicit H tiling (exercises the accumulator / tile-culling path)
    loss_reg, loss_cls = dc_result_distill_pallas(
        cls_lidar, cls_fuse_raw, reg_lidar, reg_fuse, cx, cy, rad, sig, val, tile_h=16)
    jax.block_until_ready((loss_reg, loss_cls))
    assert jnp.allclose(loss_reg, ref_reg, rtol=1e-4, atol=1e-5), (loss_reg, ref_reg)
    assert jnp.allclose(loss_cls, ref_cls, rtol=1e-4, atol=1e-5), (loss_cls, ref_cls)

    # 2) auto-selected tile size (generation-aware VMEM budget)
    loss_reg2, loss_cls2 = dc_result_distill_pallas(
        cls_lidar, cls_fuse_raw, reg_lidar, reg_fuse, cx, cy, rad, sig, val)
    jax.block_until_ready((loss_reg2, loss_cls2))
    assert jnp.allclose(loss_reg2, ref_reg, rtol=1e-4, atol=1e-5), (loss_reg2, ref_reg)
    assert jnp.allclose(loss_cls2, ref_cls, rtol=1e-4, atol=1e-5), (loss_cls2, ref_cls)

    # 3) split-H parallel axis (v7x dual-TensorCore path)
    loss_reg3, loss_cls3 = dc_result_distill_pallas(
        cls_lidar, cls_fuse_raw, reg_lidar, reg_fuse, cx, cy, rad, sig, val,
        tile_h=8, h_outer=2)
    jax.block_until_ready((loss_reg3, loss_cls3))
    assert jnp.allclose(loss_reg3, ref_reg, rtol=1e-4, atol=1e-5), (loss_reg3, ref_reg)
    assert jnp.allclose(loss_cls3, ref_cls, rtol=1e-4, atol=1e-5), (loss_cls3, ref_cls)

    # 4) bf16 feature maps (halved HBM traffic); compare against a reference fed
    #    the same bf16-quantized inputs so tolerances stay tight.
    to_bf = lambda x: x.astype(jnp.bfloat16)
    ref_reg_bf, ref_cls_bf = _reference(
        to_bf(cls_lidar).astype(jnp.float32), to_bf(cls_fuse_raw).astype(jnp.float32),
        to_bf(reg_lidar).astype(jnp.float32), to_bf(reg_fuse).astype(jnp.float32),
        cx, cy, rad, sig, val)
    loss_reg4, loss_cls4 = dc_result_distill_pallas(
        to_bf(cls_lidar), to_bf(cls_fuse_raw), to_bf(reg_lidar), to_bf(reg_fuse),
        cx, cy, rad, sig, val)
    jax.block_until_ready((loss_reg4, loss_cls4))
    assert jnp.allclose(loss_reg4, ref_reg_bf, rtol=1e-3, atol=1e-4), (loss_reg4, ref_reg_bf)
    assert jnp.allclose(loss_cls4, ref_cls_bf, rtol=1e-3, atol=1e-4), (loss_cls4, ref_cls_bf)

    print("KERNEL_OK")
</pallas_src>

<mosaic_0001>
module attributes {stable_mosaic.version = 11 : i64} {
  func.func @_distill_kernel(%arg0: i32, %arg1: i32, %arg2: i32, %arg3: memref<1x5x16x32xf32, #tpu.memory_space<vmem>>, %arg4: memref<1x5x16x32xf32, #tpu.memory_space<vmem>>, %arg5: memref<1x20x16x32xf32, #tpu.memory_space<vmem>>, %arg6: memref<1x20x16x32xf32, #tpu.memory_space<vmem>>, %arg7: memref<2x3xf32, #tpu.memory_space<smem>>, %arg8: memref<2x3xf32, #tpu.memory_space<smem>>, %arg9: memref<2x3xf32, #tpu.memory_space<smem>>, %arg10: memref<2x3xf32, #tpu.memory_space<smem>>, %arg11: memref<2x3xf32, #tpu.memory_space<smem>>, %arg12: memref<1x1x128xf32, #tpu.memory_space<vmem>>, %arg13: memref<16x32xf32, #tpu.memory_space<vmem>>) attributes {dimension_semantics = [#tpu.dimension_semantics<parallel>, #tpu.dimension_semantics<parallel>, #tpu.dimension_semantics<arbitrary>], iteration_bounds = array<i64: 2, 1, 2>, scalar_prefetch = 0 : i64, scratch_operands = 1 : i64, tpu.core_type = #tpu.core_type<tc>, window_params = [{transform_indices = @transform_0, window_bounds = array<i64: 1, 5, 16, 32>}, {transform_indices = @transform_1, window_bounds = array<i64: 1, 5, 16, 32>}, {transform_indices = @transform_2, window_bounds = array<i64: 1, 20, 16, 32>}, {transform_indices = @transform_3, window_bounds = array<i64: 1, 20, 16, 32>}, {transform_indices = @transform_4, window_bounds = array<i64: 2, 3>}, {transform_indices = @transform_5, window_bounds = array<i64: 2, 3>}, {transform_indices = @transform_6, window_bounds = array<i64: 2, 3>}, {transform_indices = @transform_7, window_bounds = array<i64: 2, 3>}, {transform_indices = @transform_8, window_bounds = array<i64: 2, 3>}, {transform_indices = @transform_9, window_bounds = array<i64: 1, 1, 128>}]} {
    %c2_i32 = arith.constant 2 : i32
    %0 = arith.muli %arg1, %c2_i32 : i32
    %1 = arith.addi %0, %arg2 : i32
    %2 = tpu.iota {dimensions = array<i32: 1>} : vector<1x32xi32>
    %3 = arith.sitofp %2 : vector<1x32xi32> to vector<1x32xf32>
    %4 = tpu.iota {dimensions = array<i32: 0>} : vector<16x1xi32>
    %c16_i32 = arith.constant 16 : i32
    %5 = arith.muli %1, %c16_i32 : i32
    %6 = vector.broadcast %5 : i32 to vector<16x1xi32>
    %7 = arith.addi %4, %6 : vector<16x1xi32>
    %8 = arith.sitofp %7 : vector<16x1xi32> to vector<16x1xf32>
    %c16_i32_0 = arith.constant 16 : i32
    %9 = arith.muli %1, %c16_i32_0 : i32
    %10 = arith.sitofp %9 : i32 to f32
    %cst = arith.constant 1.500000e+01 : f32
    %11 = arith.addf %10, %cst : f32
    %cst_1 = arith.constant -1.000000e+30 : f32
    %12 = vector.broadcast %cst_1 : f32 to vector<16x32xf32>
    %c0 = arith.constant 0 : index
    %c0_2 = arith.constant 0 : index
    %13 = vector.load %arg13[%c0, %c0_2] : memref<16x32xf32, #tpu.memory_space<vmem>>, vector<16x32xf32>
    tpu.vector_store %arg13[%c0, %c0_2], %12 {strides = array<i32>} : memref<16x32xf32, #tpu.memory_space<vmem>>, vector<16x32xf32>,
    %cst_3 = arith.constant -1.000000e+30 : f32
    %c0_i32 = arith.constant 0 : i32
    %c3_i32 = arith.constant 3 : i32
    %14 = arith.addi %c0_i32, %c3_i32 : i32
    %c1_i32 = arith.constant 1 : i32
    scf.for %arg14 = %c0_i32 to %14 step %c1_i32  : i32 {
      %92 = arith.index_cast %arg0 : i32 to index
      %93 = arith.index_cast %arg14 : i32 to index
      %94 = memref.load %arg7[%92, %93] : memref<2x3xf32, #tpu.memory_space<smem>>
      %95 = arith.index_cast %arg0 : i32 to index
      %96 = arith.index_cast %arg14 : i32 to index
      %97 = memref.load %arg8[%95, %96] : memref<2x3xf32, #tpu.memory_space<smem>>
      %98 = arith.index_cast %arg0 : i32 to index
      %99 = arith.index_cast %arg14 : i32 to index
      %100 = memref.load %arg9[%98, %99] : memref<2x3xf32, #tpu.memory_space<smem>>
      %101 = arith.index_cast %arg0 : i32 to index
      %102 = arith.index_cast %arg14 : i32 to index
      %103 = memref.load %arg10[%101, %102] : memref<2x3xf32, #tpu.memory_space<smem>>
      %104 = arith.index_cast %arg0 : i32 to index
      %105 = arith.index_cast %arg14 : i32 to index
      %106 = memref.load %arg11[%104, %105] : memref<2x3xf32, #tpu.memory_space<smem>>
      %cst_58 = arith.constant 0.000000e+00 : f32
      %107 = arith.cmpf ogt, %106, %cst_58 : f32
      %108 = arith.addf %97, %100 : f32
      %109 = arith.cmpf oge, %108, %10 : f32
      %110 = arith.andi %107, %109 : i1
      %111 = arith.subf %97, %100 : f32
      %112 = arith.cmpf ole, %111, %11 : f32
      %113 = arith.andi %110, %112 : i1
      %114 = arith.extui %113 : i1 to i32
      %c0_i32_59 = arith.constant 0 : i32
      %115 = arith.cmpi ne, %114, %c0_i32_59 : i32
      scf.if %115 {
        %116 = vector.broadcast %94 : f32 to vector<1x32xf32>
        %117 = arith.subf %3, %116 : vector<1x32xf32>
        %118 = math.absf %117 : vector<1x32xf32>
        %119 = vector.broadcast %100 : f32 to vector<1x32xf32>
        %120 = arith.cmpf ole, %118, %119 : vector<1x32xf32>
        %121 = arith.mulf %117, %117 : vector<1x32xf32>
        %122 = vector.broadcast %103 : f32 to vector<1x32xf32>
        %123 = arith.mulf %121, %122 : vector<1x32xf32>
        %124 = vector.broadcast %cst_3 : f32 to vector<1x32xf32>
        %125 = arith.select %120, %123, %124 : vector<1x32xi1>, vector<1x32xf32>
        %126 = vector.broadcast %97 : f32 to vector<16x1xf32>
        %127 = arith.subf %8, %126 : vector<16x1xf32>
        %128 = math.absf %127 : vector<16x1xf32>
        %129 = vector.broadcast %100 : f32 to vector<16x1xf32>
        %130 = arith.cmpf ole, %128, %129 : vector<16x1xf32>
        %131 = arith.mulf %127, %127 : vector<16x1xf32>
        %132 = vector.broadcast %103 : f32 to vector<16x1xf32>
        %133 = arith.mulf %131, %132 : vector<16x1xf32>
        %134 = vector.broadcast %cst_3 : f32 to vector<16x1xf32>
        %135 = arith.select %130, %133, %134 : vector<16x1xi1>, vector<16x1xf32>
        %c0_60 = arith.constant 0 : index
        %c0_61 = arith.constant 0 : index
        %136 = vector.load %arg13[%c0_60, %c0_61] : memref<16x32xf32, #tpu.memory_space<vmem>>, vector<16x32xf32>
        %137 = vector.broadcast %125 : vector<1x32xf32> to vector<16x32xf32>
        %138 = vector.broadcast %135 : vector<16x1xf32> to vector<16x32xf32>
        %139 = arith.addf %137, %138 : vector<16x32xf32>
        %140 = arith.maximumf %136, %139 : vector<16x32xf32>
        %c0_62 = arith.constant 0 : index
        %c0_63 = arith.constant 0 : index
        %141 = vector.load %arg13[%c0_62, %c0_63] : memref<16x32xf32, #tpu.memory_space<vmem>>, vector<16x32xf32>
        tpu.vector_store %arg13[%c0_62, %c0_63], %140 {strides = array<i32>} : memref<16x32xf32, #tpu.memory_space<vmem>>, vector<16x32xf32>,
      } else {
      }
    }
    %c3_i32_4 = arith.constant 3 : i32
    %c0_5 = arith.constant 0 : index
    %c0_6 = arith.constant 0 : index
    %15 = vector.load %arg13[%c0_5, %c0_6] : memref<16x32xf32, #tpu.memory_space<vmem>>, vector<16x32xf32>
    %cst_7 = arith.constant 5.000000e-01 : f32
    %cst_8 = arith.constant -1.000000e+30 : f32
    %16 = arith.mulf %cst_7, %cst_8 : f32
    %17 = vector.broadcast %16 : f32 to vector<16x32xf32>
    %18 = arith.cmpf ogt, %15, %17 : vector<16x32xf32>
    %19 = math.exp %15 : vector<16x32xf32>
    %cst_9 = arith.constant 0.000000e+00 : f32
    %20 = vector.broadcast %cst_9 : f32 to vector<16x32xf32>
    %21 = arith.select %18, %19, %20 : vector<16x32xi1>, vector<16x32xf32>
    %c0_10 = arith.constant 0 : index
    %c0_11 = arith.constant 0 : index
    %22 = vector.load %arg13[%c0_10, %c0_11] : memref<16x32xf32, #tpu.memory_space<vmem>>, vector<16x32xf32>
    tpu.vector_store %arg13[%c0_10, %c0_11], %21 {strides = array<i32>} : memref<16x32xf32, #tpu.memory_space<vmem>>, vector<16x32xf32>,
    %c0_12 = arith.constant 0 : index
    %c0_13 = arith.constant 0 : index
    %c0_14 = arith.constant 0 : index
    %c0_15 = arith.constant 0 : index
    %23 = vector.load %arg5[%c0_12, %c0_13, %c0_14, %c0_15] : memref<1x20x16x32xf32, #tpu.memory_space<vmem>>, vector<1x20x16x32xf32>
    %24 = vector.shape_cast %23 : vector<1x20x16x32xf32> to vector<20x16x32xf32>
    %c0_16 = arith.constant 0 : index
    %c0_17 = arith.constant 0 : index
    %c0_18 = arith.constant 0 : index
    %c0_19 = arith.constant 0 : index
    %25 = vector.load %arg6[%c0_16, %c0_17, %c0_18, %c0_19] : memref<1x20x16x32xf32, #tpu.memory_space<vmem>>, vector<1x20x16x32xf32>
    %26 = vector.shape_cast %25 : vector<1x20x16x32xf32> to vector<20x16x32xf32>
    %27 = arith.subf %24, %26 : vector<20x16x32xf32>
    %28 = math.absf %27 : vector<20x16x32xf32>
    %cst_20 = arith.constant 1.000000e+00 : f32
    %29 = vector.broadcast %cst_20 : f32 to vector<20x16x32xf32>
    %30 = arith.cmpf olt, %28, %29 : vector<20x16x32xf32>
    %cst_21 = arith.constant 5.000000e-01 : f32
    %31 = vector.broadcast %cst_21 : f32 to vector<20x16x32xf32>
    %32 = arith.mulf %31, %27 : vector<20x16x32xf32>
    %33 = arith.mulf %32, %27 : vector<20x16x32xf32>
    %cst_22 = arith.constant 5.000000e-01 : f32
    %34 = vector.broadcast %cst_22 : f32 to vector<20x16x32xf32>
    %35 = arith.subf %28, %34 : vector<20x16x32xf32>
    %36 = arith.select %30, %33, %35 : vector<20x16x32xi1>, vector<20x16x32xf32>
    %cst_23 = arith.constant dense<0.000000e+00> : vector<16x32xf32>
    %37 = vector.multi_reduction <add>, %36, %cst_23 [0] : vector<20x16x32xf32> to vector<16x32xf32>
    %cst_24 = arith.constant 2.000000e+01 : f32
    %38 = vector.broadcast %cst_24 : f32 to vector<16x32xf32>
    %39 = arith.divf %37, %38 : vector<16x32xf32>
    %c0_25 = arith.constant 0 : index
    %c0_26 = arith.constant 0 : index
    %40 = vector.load %arg13[%c0_25, %c0_26] : memref<16x32xf32, #tpu.memory_space<vmem>>, vector<16x32xf32>
    %41 = arith.mulf %39, %40 : vector<16x32xf32>
    %42 = vector.shape_cast %41 : vector<16x32xf32> to vector<1x16x32xf32>
    %cst_27 = arith.constant dense<0.000000e+00> : vector<1xf32>
    %43 = vector.multi_reduction <add>, %42, %cst_27 [1, 2] : vector<1x16x32xf32> to vector<1xf32>
    %44 = vector.shape_cast %43 : vector<1xf32> to vector<1x1x1xf32>
    %45 = vector.extract %44[0, 0, 0] : f32 from vector<1x1x1xf32>
    %c0_28 = arith.constant 0 : index
    %c0_29 = arith.constant 0 : index
    %c0_30 = arith.constant 0 : index
    %c0_31 = arith.constant 0 : index
    %46 = vector.load %arg3[%c0_28, %c0_29, %c0_30, %c0_31] : memref<1x5x16x32xf32, #tpu.memory_space<vmem>>, vector<1x5x16x32xf32>
    %47 = vector.shape_cast %46 : vector<1x5x16x32xf32> to vector<5x16x32xf32>
    %cst_32 = arith.constant dense<0xFF800000> : vector<16x32xf32>
    %48 = vector.multi_reduction <maximumf>, %47, %cst_32 [0] : vector<5x16x32xf32> to vector<16x32xf32>
    %c0_33 = arith.constant 0 : index
    %c0_34 = arith.constant 0 : index
    %c0_35 = arith.constant 0 : index
    %c0_36 = arith.constant 0 : index
    %49 = vector.load %arg4[%c0_33, %c0_34, %c0_35, %c0_36] : memref<1x5x16x32xf32, #tpu.memory_space<vmem>>, vector<1x5x16x32xf32>
    %50 = vector.shape_cast %49 : vector<1x5x16x32xf32> to vector<5x16x32xf32>
    %cst_37 = arith.constant dense<0xFF800000> : vector<16x32xf32>
    %51 = vector.multi_reduction <maximumf>, %50, %cst_37 [0] : vector<5x16x32xf32> to vector<16x32xf32>
    %cst_38 = arith.constant 5.000000e-01 : f32
    %52 = vector.broadcast %cst_38 : f32 to vector<16x32xf32>
    %53 = arith.mulf %51, %52 : vector<16x32xf32>
    %54 = arith.negf %53 : vector<16x32xf32>
    %55 = math.exp %54 : vector<16x32xf32>
    %cst_39 = arith.constant 1.000000e+00 : f32
    %56 = vector.broadcast %cst_39 : f32 to vector<16x32xf32>
    %57 = arith.addf %56, %55 : vector<16x32xf32>
    %58 = arith.divf %56, %57 : vector<16x32xf32>
    %59 = arith.subf %48, %58 : vector<16x32xf32>
    %60 = math.absf %59 : vector<16x32xf32>
    %c0_40 = arith.constant 0 : index
    %c0_41 = arith.constant 0 : index
    %61 = vector.load %arg13[%c0_40, %c0_41] : memref<16x32xf32, #tpu.memory_space<vmem>>, vector<16x32xf32>
    %62 = arith.mulf %60, %61 : vector<16x32xf32>
    %63 = vector.shape_cast %62 : vector<16x32xf32> to vector<1x16x32xf32>
    %cst_42 = arith.constant dense<0.000000e+00> : vector<1xf32>
    %64 = vector.multi_reduction <add>, %63, %cst_42 [1, 2] : vector<1x16x32xf32> to vector<1xf32>
    %65 = vector.shape_cast %64 : vector<1xf32> to vector<1x1x1xf32>
    %66 = vector.extract %65[0, 0, 0] : f32 from vector<1x1x1xf32>
    %c0_43 = arith.constant 0 : index
    %c0_44 = arith.constant 0 : index
    %67 = vector.load %arg13[%c0_43, %c0_44] : memref<16x32xf32, #tpu.memory_space<vmem>>, vector<16x32xf32>
    %68 = vector.shape_cast %67 : vector<16x32xf32> to vector<1x16x32xf32>
    %cst_45 = arith.constant dense<0.000000e+00> : vector<1xf32>
    %69 = vector.multi_reduction <add>, %68, %cst_45 [1, 2] : vector<1x16x32xf32> to vector<1xf32>
    %70 = vector.shape_cast %69 : vector<1xf32> to vector<1x1x1xf32>
    %71 = vector.extract %70[0, 0, 0] : f32 from vector<1x1x1xf32>
    %72 = tpu.iota {dimensions = array<i32: 2>} : vector<1x1x128xi32>
    %c0_i32_46 = arith.constant 0 : i32
    %73 = vector.broadcast %c0_i32_46 : i32 to vector<1x1x128xi32>
    %74 = arith.cmpi eq, %72, %73 : vector<1x1x128xi32>
    %c1_i32_47 = arith.constant 1 : i32
    %75 = vector.broadcast %c1_i32_47 : i32 to vector<1x1x128xi32>
    %76 = arith.cmpi eq, %72, %75 : vector<1x1x128xi32>
    %c2_i32_48 = arith.constant 2 : i32
    %77 = vector.broadcast %c2_i32_48 : i32 to vector<1x1x128xi32>
    %78 = arith.cmpi eq, %72, %77 : vector<1x1x128xi32>
    %cst_49 = arith.constant 0.000000e+00 : f32
    %79 = vector.broadcast %71 : f32 to vector<1x1x128xf32>
    %80 = vector.broadcast %cst_49 : f32 to vector<1x1x128xf32>
    %81 = arith.select %78, %79, %80 : vector<1x1x128xi1>, vector<1x1x128xf32>
    %82 = vector.broadcast %66 : f32 to vector<1x1x128xf32>
    %83 = arith.select %76, %82, %81 : vector<1x1x128xi1>, vector<1x1x128xf32>
    %84 = vector.broadcast %45 : f32 to vector<1x1x128xf32>
    %85 = arith.select %74, %84, %83 : vector<1x1x128xi1>, vector<1x1x128xf32>
    %c0_i32_50 = arith.constant 0 : i32
    %86 = arith.cmpi eq, %arg2, %c0_i32_50 : i32
    %87 = arith.extui %86 : i1 to i32
    %c0_i32_51 = arith.constant 0 : i32
    %88 = arith.cmpi ne, %87, %c0_i32_51 : i32
    scf.if %88 {
      %cst_58 = arith.constant 0.000000e+00 : f32
      %92 = vector.broadcast %cst_58 : f32 to vector<1x1x128xf32>
      %c0_59 = arith.constant 0 : index
      %c0_60 = arith.constant 0 : index
      %c0_61 = arith.constant 0 : index
      %93 = vector.load %arg12[%c0_59, %c0_60, %c0_61] : memref<1x1x128xf32, #tpu.memory_space<vmem>>, vector<1x1x128xf32>
      tpu.vector_store %arg12[%c0_59, %c0_60, %c0_61], %92 {strides = array<i32>} : memref<1x1x128xf32, #tpu.memory_space<vmem>>, vector<1x1x128xf32>,
    } else {
    }
    %c0_52 = arith.constant 0 : index
    %c0_53 = arith.constant 0 : index
    %c0_54 = arith.constant 0 : index
    %89 = vector.load %arg12[%c0_52, %c0_53, %c0_54] : memref<1x1x128xf32, #tpu.memory_space<vmem>>, vector<1x1x128xf32>
    %90 = arith.addf %89, %85 : vector<1x1x128xf32>
    %c0_55 = arith.constant 0 : index
    %c0_56 = arith.constant 0 : index
    %c0_57 = arith.constant 0 : index
    %91 = vector.load %arg12[%c0_55, %c0_56, %c0_57] : memref<1x1x128xf32, #tpu.memory_space<vmem>>, vector<1x1x128xf32>
    tpu.vector_store %arg12[%c0_55, %c0_56, %c0_57], %90 {strides = array<i32>} : memref<1x1x128xf32, #tpu.memory_space<vmem>>, vector<1x1x128xf32>,
    return
  }
  func.func @transform_0(%arg0: i32, %arg1: i32, %arg2: i32) -> (i32, i32, i32, i32) {
    %c2_i32 = arith.constant 2 : i32
    %0 = arith.muli %arg1, %c2_i32 : i32
    %1 = arith.addi %0, %arg2 : i32
    %c0_i32 = arith.constant 0 : i32
    %c0_i32_0 = arith.constant 0 : i32
    %c0_i32_1 = arith.constant 0 : i32
    return %arg0, %c0_i32, %1, %c0_i32_0 : i32, i32, i32, i32
  }
  func.func @transform_1(%arg0: i32, %arg1: i32, %arg2: i32) -> (i32, i32, i32, i32) {
    %c2_i32 = arith.constant 2 : i32
    %0 = arith.muli %arg1, %c2_i32 : i32
    %1 = arith.addi %0, %arg2 : i32
    %c0_i32 = arith.constant 0 : i32
    %c0_i32_0 = arith.constant 0 : i32
    %c0_i32_1 = arith.constant 0 : i32
    return %arg0, %c0_i32, %1, %c0_i32_0 : i32, i32, i32, i32
  }
  func.func @transform_2(%arg0: i32, %arg1: i32, %arg2: i32) -> (i32, i32, i32, i32) {
    %c2_i32 = arith.constant 2 : i32
    %0 = arith.muli %arg1, %c2_i32 : i32
    %1 = arith.addi %0, %arg2 : i32
    %c0_i32 = arith.constant 0 : i32
    %c0_i32_0 = arith.constant 0 : i32
    %c0_i32_1 = arith.constant 0 : i32
    return %arg0, %c0_i32, %1, %c0_i32_0 : i32, i32, i32, i32
  }
  func.func @transform_3(%arg0: i32, %arg1: i32, %arg2: i32) -> (i32, i32, i32, i32) {
    %c2_i32 = arith.constant 2 : i32
    %0 = arith.muli %arg1, %c2_i32 : i32
    %1 = arith.addi %0, %arg2 : i32
    %c0_i32 = arith.constant 0 : i32
    %c0_i32_0 = arith.constant 0 : i32
    %c0_i32_1 = arith.constant 0 : i32
    return %arg0, %c0_i32, %1, %c0_i32_0 : i32, i32, i32, i32
  }
  func.func @transform_4(%arg0: i32, %arg1: i32, %arg2: i32) -> (i32, i32) {
    %c0_i32 = arith.constant 0 : i32
    %c0_i32_0 = arith.constant 0 : i32
    %c0_i32_1 = arith.constant 0 : i32
    return %c0_i32, %c0_i32_0 : i32, i32
  }
  func.func @transform_5(%arg0: i32, %arg1: i32, %arg2: i32) -> (i32, i32) {
    %c0_i32 = arith.constant 0 : i32
    %c0_i32_0 = arith.constant 0 : i32
    %c0_i32_1 = arith.constant 0 : i32
    return %c0_i32, %c0_i32_0 : i32, i32
  }
  func.func @transform_6(%arg0: i32, %arg1: i32, %arg2: i32) -> (i32, i32) {
    %c0_i32 = arith.constant 0 : i32
    %c0_i32_0 = arith.constant 0 : i32
    %c0_i32_1 = arith.constant 0 : i32
    return %c0_i32, %c0_i32_0 : i32, i32
  }
  func.func @transform_7(%arg0: i32, %arg1: i32, %arg2: i32) -> (i32, i32) {
    %c0_i32 = arith.constant 0 : i32
    %c0_i32_0 = arith.constant 0 : i32
    %c0_i32_1 = arith.constant 0 : i32
    return %c0_i32, %c0_i32_0 : i32, i32
  }
  func.func @transform_8(%arg0: i32, %arg1: i32, %arg2: i32) -> (i32, i32) {
    %c0_i32 = arith.constant 0 : i32
    %c0_i32_0 = arith.constant 0 : i32
    %c0_i32_1 = arith.constant 0 : i32
    return %c0_i32, %c0_i32_0 : i32, i32
  }
  func.func @transform_9(%arg0: i32, %arg1: i32, %arg2: i32) -> (i32, i32, i32) {
    %c1_i32 = arith.constant 1 : i32
    %0 = arith.muli %arg0, %c1_i32 : i32
    %1 = arith.addi %0, %arg1 : i32
    %c0_i32 = arith.constant 0 : i32
    %c0_i32_0 = arith.constant 0 : i32
    %c0_i32_1 = arith.constant 0 : i32
    return %1, %c0_i32, %c0_i32_0 : i32, i32, i32
  }
}

</mosaic_0001>

<llo_original>
// kernel: tpu_custom_call.1
$region0: #{tpu_custom_call.1}
  #allocation0 [shape = 'u32[]', space=smem, size = 0x4, offset = 0x4, fixed_abs, tag = 'smem constant byte address 0x4 - core index']
  #allocation1 [shape = 'u32[144,128]{1,0:T(1,128)}', space=vmem, size = 0x12000, scoped, tag = 'internal scratch']
  #allocation2 [shape = 'f32[16,32]{1,0:T(8,128)}', space=vmem, size = 0x2000, scoped, tag = 'scratch operand']
  #allocation20 [shape = 's32[]', space=sflag, size = 0x4, offset = 0, fixed_abs, tag = 'sflag constant byte address 0x0 - dummy sync flag']
  #allocation22 [shape = 's32[]', space=sflag, size = 0x4, offset = 0, fixed_abs, tag = 'sflag constant byte address 0x0 - dummy sync flag']
  #allocation24 [shape = 's32[]', space=sflag, size = 0x4, offset = 0, fixed_abs, tag = 'sflag constant byte address 0x0 - dummy sync flag']
  #allocation26 [shape = 's32[]', space=sflag, size = 0x4, offset = 0, fixed_abs, tag = 'sflag constant byte address 0x0 - dummy sync flag']
  %s0 = inlined_call_operand.hbm [shape: f32[2,5,32,32], index: 0, kind: input, shape index: {}]
  %s1 = inlined_call_operand.hbm [shape: f32[2,5,32,32], index: 1, kind: input, shape index: {}]
  %s2 = inlined_call_operand.hbm [shape: f32[2,20,32,32], index: 2, kind: input, shape index: {}]
  %s3 = inlined_call_operand.hbm [shape: f32[2,20,32,32], index: 3, kind: input, shape index: {}]
  %s4 = inlined_call_operand.vmem [shape: f32[2,3], index: 4, kind: input, shape index: {}]
  %s5 = inlined_call_operand.vmem [shape: f32[2,3], index: 5, kind: input, shape index: {}]
  %s6 = inlined_call_operand.vmem [shape: f32[2,3], index: 6, kind: input, shape index: {}]
  %s7 = inlined_call_operand.vmem [shape: f32[2,3], index: 7, kind: input, shape index: {}]
  %s8 = inlined_call_operand.vmem [shape: f32[2,3], index: 8, kind: input, shape index: {}]
  %s9 = inlined_call_operand.hbm [shape: f32[2,1,128], index: 9, kind: output, shape index: {}]
  %s10 = sld [smem:[#allocation0]]
  $region120: #{tpu_custom_call.1} parent=0
    _
  %s12 = ssub.s32 1, %s10
  %s13 = scalar_select 0, %s12, %s10
  $region1: #{tpu_custom_call.1} parent=0
    #allocation3 [shape = 'u8[81920]{0}', space=vmem, size = 0x14000, scoped, tag = 'input window, operand 0']
    #allocation4 [shape = 's32[2]{0}', space=sflag, size = 0x8, scoped, tag = 'scoped memory for tpu_custom_call.1']
    #allocation5 [shape = 's32[2]{0}', space=sflag, size = 0x8, scoped, tag = 'scoped memory for tpu_custom_call.1']
    #allocation6 [shape = 's32[2]{0}', space=sflag, size = 0x8, scoped, tag = 'scoped memory for tpu_custom_call.1']
    #allocation7 [shape = 'u8[81920]{0}', space=vmem, size = 0x14000, scoped, tag = 'input window, operand 1']
    #allocation8 [shape = 's32[2]{0}', space=sflag, size = 0x8, scoped, tag = 'scoped memory for tpu_custom_call.1']
    #allocation9 [shape = 'u8[327680]{0}', space=vmem, size = 0x50000, scoped, tag = 'input window, operand 2']
    #allocation10 [shape = 'u8[327680]{0}', space=vmem, size = 0x50000, scoped, tag = 'input window, operand 3']
    #allocation11 [shape = 's32[2]{0}', space=sflag, size = 0x8, scoped, tag = 'scoped memory for tpu_custom_call.1']
    #allocation12 [shape = 'u8[1024]{0}', space=smem, size = 0x400, scoped, tag = 'input window, operand 4, single buffered']
    #allocation13 [shape = 'u8[1024]{0}', space=smem, size = 0x400, scoped, tag = 'input window, operand 5, single buffered']
    #allocation14 [shape = 's32[1]{0}', space=sflag, size = 0x4, scoped, tag = 'scoped memory for tpu_custom_call.1']
    #allocation15 [shape = 'u8[1024]{0}', space=smem, size = 0x400, scoped, tag = 'input window, operand 6, single buffered']
    #allocation16 [shape = 'u8[1024]{0}', space=smem, size = 0x400, scoped, tag = 'input window, operand 7, single buffered']
    #allocation17 [shape = 's32[1]{0}', space=sflag, size = 0x4, scoped, tag = 'scoped memory for tpu_custom_call.1']
    #allocation18 [shape = 'u8[1024]{0}', space=smem, size = 0x400, scoped, tag = 'input window, operand 8, single buffered']
    #allocation19 [shape = 'u8[1024]{0}', space=vmem, size = 0x400, scoped, tag = 'output window, operand 0']
    %14 = vsyncpa [#allocation4], 0
    %s15 = scalar_lea.sflag [#allocation4], 1
    %16 = vsyncpa %s15, 0
    %17 = vsyncpa [#allocation8], 0
    %s18 = scalar_lea.sflag [#allocation8], 1
    %19 = vsyncpa %s18, 0
    %20 = vsyncpa [#allocation11], 0
    %s21 = scalar_lea.sflag [#allocation11], 1
    %22 = vsyncpa %s21, 0
    %23 = vsyncpa [#allocation6], 0
    %24 = vsyncpa [#allocation14], 0
    %25 = vsyncpa [#allocation17], 0
    %26 = vsyncpa [#allocation5], 0
    %s27 = scalar_lea.sflag [#allocation5], 1
    %28 = vsyncpa %s27, 0
    loop: start=0, step=1, limit=6
    $region2: #{tpu_custom_call.1} parent=1 // loop_pre_header
      _
    $region3: #{tpu_custom_call.1} parent=1 // loop_header
      %s30 = sphi 0, %s34
      %p31 = scmp.ge.s32.totalorder %s30, 6
      %s37 = sphi 0, %s56
      %s38 = sphi 0, %s52
      %s39 = sphi 0, %s48
      %s40 = sphi 0, %s37
      %s41 = sphi 0, %s38
      %s42 = sphi 0, %s39
      %s43 = sphi 0, %s40
      %s44 = sphi 0, %s41
      %s45 = sphi 0, %s42
      %s65 = sphi 0, %s67
      %s68 = sphi 0, %s65
      %s69 = sphi 0, %s68
      %s85 = sphi 0, %s69
      %s97 = sphi 0, %s99
      %s100 = sphi 0, %s97
      %s101 = sphi 0, %s100
      %s117 = sphi 0, %s101
      %s129 = sphi 0, %s131
      %s132 = sphi 0, %s129
      %s133 = sphi 0, %s132
      %s149 = sphi 0, %s133
      %s161 = sphi 0, %s163
      %s164 = sphi 0, %s161
      %s165 = sphi 0, %s164
      %s181 = sphi 0, %s165
      %s185 = sphi 0, %s185
      %s187 = sphi 0, %s185
      %s188 = sphi 0, %s187
      %s202 = sphi 0, %s188
      %s206 = sphi 0, %s206
      %s208 = sphi 0, %s206
      %s209 = sphi 0, %s208
      %s223 = sphi 0, %s209
      %s227 = sphi 0, %s227
      %s229 = sphi 0, %s227
      %s230 = sphi 0, %s229
      %s244 = sphi 0, %s230
      %s248 = sphi 0, %s248
      %s250 = sphi 0, %s248
      %s251 = sphi 0, %s250
      %s265 = sphi 0, %s251
      %s269 = sphi 0, %s269
      %s271 = sphi 0, %s269
      %s272 = sphi 0, %s271
      %s286 = sphi 0, %s272
      %s294 = sphi 0, %s296
      %s297 = sphi 0, %s294
      %s298 = sphi 0, %s297
      %s314 = sphi 0, %s298
    $region4: #{tpu_custom_call.1} parent=1 // loop_header_branch
      %33 = sbr.rel (%p31) target = $region8
    $region5: #{tpu_custom_call.1} parent=1 // loop_body
      %s35 = ssub.s32 %s30, 1
      %s36 = ssub.s32 %s30, 2
      %s46 = sadd.s32 1, %s39
      %p47 = scmp.ge.s32.totalorder %s46, 2
      %s48 = scalar_select %p47, 0, %s46
      %s49 = sadd.s32 1, %s38
      %s50 = scalar_select %p47, %s49, %s38
      %p51 = scmp.ge.s32.totalorder %s50, 1
      %s52 = scalar_select %p51, 0, %s50
      %s53 = sadd.s32 1, %s37
      %s54 = scalar_select %p51, %s53, %s37
      %p55 = scmp.ge.s32.totalorder %s54, 2
      %s56 = scalar_select %p55, 0, %s54
      %s57 = smul.u32 %s38, 2
      %s58 = sadd.s32 %s57, %s39
      %s59 = smul.u32 %s52, 2
      %s60 = sadd.s32 %s59, %s48
      %s61 = ssub.s32 %s37, %s56
      %s62 = ssub.s32 %s58, %s60
      %s63 = sor.u32 %s61, %s62
      %p64 = scmp.eq.s32.totalorder %s63, 0
      %s66 = sadd.s32 %s65, 1
      %s67 = scalar_select %p64, %s65, %s66
      %p70 = pneg %p64
      %p71 = scmp.eq.s32.totalorder %s30, 3
      %p72 = por %p70, %p71
      %p73 = scmp.ne.s32.totalorder %s65, %s68
      %p74 = scmp.eq.s32.totalorder %s30, 0
      %p75 = por %p73, %p74
      %p76 = scmp.ne.s32.totalorder %s65, %s68
      %p77 = scmp.eq.s32.totalorder %s35, 3
      %p78 = por %p76, %p77
      %p79 = scmp.ne.s32.totalorder %s68, %s69
      %p80 = scmp.eq.s32.totalorder %s35, 0
      %p81 = por %p79, %p80
      %p82 = scmp.ne.s32.totalorder %s68, %s69
      %p83 = scmp.eq.s32.totalorder %s36, 3
      %p84 = por %p82, %p83
      %p86 = scmp.ne.s32.totalorder %s69, %s85
      %p87 = scmp.eq.s32.totalorder %s36, 0
      %p88 = por %p86, %p87
      %s89 = smul.u32 %s38, 2
      %s90 = sadd.s32 %s89, %s39
      %s91 = smul.u32 %s52, 2
      %s92 = sadd.s32 %s91, %s48
      %s93 = ssub.s32 %s37, %s56
      %s94 = ssub.s32 %s90, %s92
      %s95 = sor.u32 %s93, %s94
      %p96 = scmp.eq.s32.totalorder %s95, 0
      %s98 = sadd.s32 %s97, 1
      %s99 = scalar_select %p96, %s97, %s98
      %p102 = pneg %p96
      %p103 = scmp.eq.s32.totalorder %s30, 3
      %p104 = por %p102, %p103
      %p105 = scmp.ne.s32.totalorder %s97, %s100
      %p106 = scmp.eq.s32.totalorder %s30, 0
      %p107 = por %p105, %p106
      %p108 = scmp.ne.s32.totalorder %s97, %s100
      %p109 = scmp.eq.s32.totalorder %s35, 3
      %p110 = por %p108, %p109
      %p111 = scmp.ne.s32.totalorder %s100, %s101
      %p112 = scmp.eq.s32.totalorder %s35, 0
      %p113 = por %p111, %p112
      %p114 = scmp.ne.s32.totalorder %s100, %s101
      %p115 = scmp.eq.s32.totalorder %s36, 3
      %p116 = por %p114, %p115
      %p118 = scmp.ne.s32.totalorder %s101, %s117
      %p119 = scmp.eq.s32.totalorder %s36, 0
      %p120 = por %p118, %p119
      %s121 = smul.u32 %s38, 2
      %s122 = sadd.s32 %s121, %s39
      %s123 = smul.u32 %s52, 2
      %s124 = sadd.s32 %s123, %s48
      %s125 = ssub.s32 %s37, %s56
      %s126 = ssub.s32 %s122, %s124
      %s127 = sor.u32 %s125, %s126
      %p128 = scmp.eq.s32.totalorder %s127, 0
      %s130 = sadd.s32 %s129, 1
      %s131 = scalar_select %p128, %s129, %s130
      %p134 = pneg %p128
      %p135 = scmp.eq.s32.totalorder %s30, 3
      %p136 = por %p134, %p135
      %p137 = scmp.ne.s32.totalorder %s129, %s132
      %p138 = scmp.eq.s32.totalorder %s30, 0
      %p139 = por %p137, %p138
      %p140 = scmp.ne.s32.totalorder %s129, %s132
      %p141 = scmp.eq.s32.totalorder %s35, 3
      %p142 = por %p140, %p141
      %p143 = scmp.ne.s32.totalorder %s132, %s133
      %p144 = scmp.eq.s32.totalorder %s35, 0
      %p145 = por %p143, %p144
      %p146 = scmp.ne.s32.totalorder %s132, %s133
      %p147 = scmp.eq.s32.totalorder %s36, 3
      %p148 = por %p146, %p147
      %p150 = scmp.ne.s32.totalorder %s133, %s149
      %p151 = scmp.eq.s32.totalorder %s36, 0
      %p152 = por %p150, %p151
      %s153 = smul.u32 %s38, 2
      %s154 = sadd.s32 %s153, %s39
      %s155 = smul.u32 %s52, 2
      %s156 = sadd.s32 %s155, %s48
      %s157 = ssub.s32 %s37, %s56
      %s158 = ssub.s32 %s154, %s156
      %s159 = sor.u32 %s157, %s158
      %p160 = scmp.eq.s32.totalorder %s159, 0
      %s162 = sadd.s32 %s161, 1
      %s163 = scalar_select %p160, %s161, %s162
      %p166 = pneg %p160
      %p167 = scmp.eq.s32.totalorder %s30, 3
      %p168 = por %p166, %p167
      %p169 = scmp.ne.s32.totalorder %s161, %s164
      %p170 = scmp.eq.s32.totalorder %s30, 0
      %p171 = por %p169, %p170
      %p172 = scmp.ne.s32.totalorder %s161, %s164
      %p173 = scmp.eq.s32.totalorder %s35, 3
      %p174 = por %p172, %p173
      %p175 = scmp.ne.s32.totalorder %s164, %s165
      %p176 = scmp.eq.s32.totalorder %s35, 0
      %p177 = por %p175, %p176
      %p178 = scmp.ne.s32.totalorder %s164, %s165
      %p179 = scmp.eq.s32.totalorder %s36, 3
      %p180 = por %p178, %p179
      %p182 = scmp.ne.s32.totalorder %s165, %s181
      %p183 = scmp.eq.s32.totalorder %s36, 0
      %p184 = por %p182, %p183
      %s186 = sadd.s32 %s185, 1
      %p189 = scmp.eq.s32.totalorder %s30, 3
      %p190 = scmp.ne.s32.totalorder %s185, %s187
      %p191 = scmp.eq.s32.totalorder %s30, 0
      %p192 = por %p190, %p191
      %p193 = scmp.ne.s32.totalorder %s185, %s187
      %p194 = scmp.eq.s32.totalorder %s35, 3
      %p195 = por %p193, %p194
      %p196 = scmp.ne.s32.totalorder %s187, %s188
      %p197 = scmp.eq.s32.totalorder %s35, 0
      %p198 = por %p196, %p197
      %p199 = scmp.ne.s32.totalorder %s187, %s188
      %p200 = scmp.eq.s32.totalorder %s36, 3
      %p201 = por %p199, %p200
      %p203 = scmp.ne.s32.totalorder %s188, %s202
      %p204 = scmp.eq.s32.totalorder %s36, 0
      %p205 = por %p203, %p204
      %s207 = sadd.s32 %s206, 1
      %p210 = scmp.eq.s32.totalorder %s30, 3
      %p211 = scmp.ne.s32.totalorder %s206, %s208
      %p212 = scmp.eq.s32.totalorder %s30, 0
      %p213 = por %p211, %p212
      %p214 = scmp.ne.s32.totalorder %s206, %s208
      %p215 = scmp.eq.s32.totalorder %s35, 3
      %p216 = por %p214, %p215
      %p217 = scmp.ne.s32.totalorder %s208, %s209
      %p218 = scmp.eq.s32.totalorder %s35, 0
      %p219 = por %p217, %p218
      %p220 = scmp.ne.s32.totalorder %s208, %s209
      %p221 = scmp.eq.s32.totalorder %s36, 3
      %p222 = por %p220, %p221
      %p224 = scmp.ne.s32.totalorder %s209, %s223
      %p225 = scmp.eq.s32.totalorder %s36, 0
      %p226 = por %p224, %p225
      %s228 = sadd.s32 %s227, 1
      %p231 = scmp.eq.s32.totalorder %s30, 3
      %p232 = scmp.ne.s32.totalorder %s227, %s229
      %p233 = scmp.eq.s32.totalorder %s30, 0
      %p234 = por %p232, %p233
      %p235 = scmp.ne.s32.totalorder %s227, %s229
      %p236 = scmp.eq.s32.totalorder %s35, 3
      %p237 = por %p235, %p236
      %p238 = scmp.ne.s32.totalorder %s229, %s230
      %p239 = scmp.eq.s32.totalorder %s35, 0
      %p240 = por %p238, %p239
      %p241 = scmp.ne.s32.totalorder %s229, %s230
      %p242 = scmp.eq.s32.totalorder %s36, 3
      %p243 = por %p241, %p242
      %p245 = scmp.ne.s32.totalorder %s230, %s244
      %p246 = scmp.eq.s32.totalorder %s36, 0
      %p247 = por %p245, %p246
      %s249 = sadd.s32 %s248, 1
      %p252 = scmp.eq.s32.totalorder %s30, 3
      %p253 = scmp.ne.s32.totalorder %s248, %s250
      %p254 = scmp.eq.s32.totalorder %s30, 0
      %p255 = por %p253, %p254
      %p256 = scmp.ne.s32.totalorder %s248, %s250
      %p257 = scmp.eq.s32.totalorder %s35, 3
      %p258 = por %p256, %p257
      %p259 = scmp.ne.s32.totalorder %s250, %s251
      %p260 = scmp.eq.s32.totalorder %s35, 0
      %p261 = por %p259, %p260
      %p262 = scmp.ne.s32.totalorder %s250, %s251
      %p263 = scmp.eq.s32.totalorder %s36, 3
      %p264 = por %p262, %p263
      %p266 = scmp.ne.s32.totalorder %s251, %s265
      %p267 = scmp.eq.s32.totalorder %s36, 0
      %p268 = por %p266, %p267
      %s270 = sadd.s32 %s269, 1
      %p273 = scmp.eq.s32.totalorder %s30, 3
      %p274 = scmp.ne.s32.totalorder %s269, %s271
      %p275 = scmp.eq.s32.totalorder %s30, 0
      %p276 = por %p274, %p275
      %p277 = scmp.ne.s32.totalorder %s269, %s271
      %p278 = scmp.eq.s32.totalorder %s35, 3
      %p279 = por %p277, %p278
      %p280 = scmp.ne.s32.totalorder %s271, %s272
      %p281 = scmp.eq.s32.totalorder %s35, 0
      %p282 = por %p280, %p281
      %p283 = scmp.ne.s32.totalorder %s271, %s272
      %p284 = scmp.eq.s32.totalorder %s36, 3
      %p285 = por %p283, %p284
      %p287 = scmp.ne.s32.totalorder %s272, %s286
      %p288 = scmp.eq.s32.totalorder %s36, 0
      %p289 = por %p287, %p288
      %s290 = sadd.s32 %s37, %s38
      %s291 = sadd.s32 %s56, %s52
      %s292 = ssub.s32 %s290, %s291
      %p293 = scmp.eq.s32.totalorder %s292, 0
      %s295 = sadd.s32 %s294, 1
      %s296 = scalar_select %p293, %s294, %s295
      %p299 = pneg %p293
      %p300 = scmp.eq.s32.totalorder %s30, 3
      %p301 = por %p299, %p300
      %p302 = scmp.ne.s32.totalorder %s294, %s297
      %p303 = scmp.eq.s32.totalorder %s30, 0
      %p304 = por %p302, %p303
      %p305 = scmp.ne.s32.totalorder %s294, %s297
      %p306 = scmp.eq.s32.totalorder %s35, 3
      %p307 = por %p305, %p306
      %p308 = scmp.ne.s32.totalorder %s297, %s298
      %p309 = scmp.eq.s32.totalorder %s35, 0
      %p310 = por %p308, %p309
      %p311 = scmp.ne.s32.totalorder %s297, %s298
      %p312 = scmp.eq.s32.totalorder %s36, 3
      %p313 = por %p311, %p312
      %p315 = scmp.ne.s32.totalorder %s298, %s314
      %p316 = scmp.eq.s32.totalorder %s36, 0
      %p317 = por %p315, %p316
      %p318 = scmp.le.s32.totalorder 1, %s30
      %p319 = scmp.lt.s32.totalorder %s30, 5
      %p320 = pnand %p318, %p319
      %p321 = pneg %p320
      // Predicated region
      $region9: #{tpu_custom_call.1} parent=5 // pred_check
        _
      $region10: #{tpu_custom_call.1} parent=5 // pred_check_branch
        %323 = sbr.rel (%p320) target = $region12
      $region11: #{tpu_custom_call.1} parent=5 // pred_region
        %s324 = ssub.s32 %s30, 1
        // Predicated region
        $region13: #{tpu_custom_call.1} parent=11 // pred_check
          %p325 = pneg %p198
        $region14: #{tpu_custom_call.1} parent=11 // pred_check_branch
          %327 = sbr.rel (%p325) target = $region16
        $region15: #{tpu_custom_call.1} parent=11 // pred_region
          %s329 = ssub.s32 32, 32
          %330 = vsyncadd [#allocation6], %s329
          %s332 = sshll.u32 %s4, 4
          %s333 = int_to_ptr.vmem [resolvable:$true] %s332
          %335 = dma.vmem_to_smem %s333, 32, [#allocation12], [#allocation6]
        $region16: #{tpu_custom_call.1} parent=11 // pred_fallthru
          _
        // Predicated region
        $region17: #{tpu_custom_call.1} parent=11 // pred_check
          %p336 = pneg %p219
        $region18: #{tpu_custom_call.1} parent=11 // pred_check_branch
          %338 = sbr.rel (%p336) target = $region20
        $region19: #{tpu_custom_call.1} parent=11 // pred_region
          %s340 = ssub.s32 32, 32
          %341 = vsyncadd [#allocation14], %s340
          %s343 = sshll.u32 %s5, 4
          %s344 = int_to_ptr.vmem [resolvable:$true] %s343
          %346 = dma.vmem_to_smem %s344, 32, [#allocation13], [#allocation14]
        $region20: #{tpu_custom_call.1} parent=11 // pred_fallthru
          _
        // Predicated region
        $region21: #{tpu_custom_call.1} parent=11 // pred_check
          %p347 = pneg %p240
        $region22: #{tpu_custom_call.1} parent=11 // pred_check_branch
          %349 = sbr.rel (%p347) target = $region24
        $region23: #{tpu_custom_call.1} parent=11 // pred_region
          %s351 = ssub.s32 32, 32
          %352 = vsyncadd [#allocation14], %s351
          %s354 = sshll.u32 %s6, 4
          %s355 = int_to_ptr.vmem [resolvable:$true] %s354
          %357 = dma.vmem_to_smem %s355, 32, [#allocation15], [#allocation14]
        $region24: #{tpu_custom_call.1} parent=11 // pred_fallthru
          _
        // Predicated region
        $region25: #{tpu_custom_call.1} parent=11 // pred_check
          %p358 = pneg %p261
        $region26: #{tpu_custom_call.1} parent=11 // pred_check_branch
          %360 = sbr.rel (%p358) target = $region28
        $region27: #{tpu_custom_call.1} parent=11 // pred_region
          %s362 = ssub.s32 32, 32
          %363 = vsyncadd [#allocation17], %s362
          %s365 = sshll.u32 %s7, 4
          %s366 = int_to_ptr.vmem [resolvable:$true] %s365
          %368 = dma.vmem_to_smem %s366, 32, [#allocation16], [#allocation17]
        $region28: #{tpu_custom_call.1} parent=11 // pred_fallthru
          _
        // Predicated region
        $region29: #{tpu_custom_call.1} parent=11 // pred_check
          %p369 = pneg %p282
        $region30: #{tpu_custom_call.1} parent=11 // pred_check_branch
          %371 = sbr.rel (%p369) target = $region32
        $region31: #{tpu_custom_call.1} parent=11 // pred_region
          %s373 = ssub.s32 32, 32
          %374 = vsyncadd [#allocation17], %s373
          %s376 = sshll.u32 %s8, 4
          %s377 = int_to_ptr.vmem [resolvable:$true] %s376
          %379 = dma.vmem_to_smem %s377, 32, [#allocation18], [#allocation17]
        $region32: #{tpu_custom_call.1} parent=11 // pred_fallthru
          _
      $region12: #{tpu_custom_call.1} parent=5 // pred_fallthru
        _
      %p380 = scmp.lt.s32.totalorder %s30, 4
      // Predicated region
      $region33: #{tpu_custom_call.1} parent=5 // pred_check
        %p381 = pneg %p380
      $region34: #{tpu_custom_call.1} parent=5 // pred_check_branch
        %383 = sbr.rel (%p381) target = $region36
      $region35: #{tpu_custom_call.1} parent=5 // pred_region
        // Predicated region
        $region37: #{tpu_custom_call.1} parent=35 // pred_check
          %p384 = pneg %p75
        $region38: #{tpu_custom_call.1} parent=35 // pred_check_branch
          %386 = sbr.rel (%p384) target = $region40
        $region39: #{tpu_custom_call.1} parent=35 // pred_region
          #allocation21 [shape = 'u32[6]{0}', space=smem, size = 0x18, scoped, tag = 'DMA stride descriptor']
          %s387 = sand.u32 %s65, 1
          %s388 = scalar_lea.sflag [#allocation4], %s387
          %s389 = sand.u32 %s65, 1
          %s390 = smul.addr %s389, 80
          %s391 = scalar_lea.vmem [#allocation3], %s390
          %s392 = smul.u32 %s38, 2
          %s393 = sadd.s32 %s392, %s39
          %s394 = smul.u32 2, %s393
          %s396 = ssub.s32 1280, 1280
          %397 = vsyncadd %s388, %s396
          %s398 = smul.addr %s37, 20
          %s399 = sadd.s32 %s394, %s398
          %s400 = smul.addr %s399, 128
          %s401 = scalar_lea.hbm %s0, %s400
          %s403 = sshll.u32 1, 14
          %s404 = sxor.u32 4294967295, %s403
          %s406 = sld [smem:[#allocation0]]
          %s407 = sadd.s32 2, %s406
          %s409 = sshll.u32 7, 26
          %s410 = sxor.u32 4294967295, %s409
          %s411 = sand.u32 0, %s410
          %s412 = sshll.u32 %s407, 26
          %s413 = sor.u32 %s411, %s412
          %s414 = sshll.u32 %s391, 4
          %s415 = int_to_ptr.vmem [resolvable:$true] %s414
          %421 = sst [smem:[#allocation21]] 512
          %s422 = scalar_lea.smem [#allocation21], 1
          %423 = sst [smem:[%s422]] 256
          %s424 = scalar_lea.smem [#allocation21], 2
          %425 = sst [smem:[%s424]] 2
          %s426 = scalar_lea.smem [#allocation21], 3
          %427 = sst [smem:[%s426]] 128
          %s428 = scalar_lea.smem [#allocation21], 4
          %429 = sst [smem:[%s428]] 128
          %s430 = scalar_lea.smem [#allocation21], 5
          %431 = sst [smem:[%s430]] 8
          %433 = dma.general %s401, 1280, %s415, %s388, [#allocation20], [#allocation21], %s413, 0
        $region40: #{tpu_custom_call.1} parent=35 // pred_fallthru
          _
        // Predicated region
        $region41: #{tpu_custom_call.1} parent=35 // pred_check
          %p434 = pneg %p107
        $region42: #{tpu_custom_call.1} parent=35 // pred_check_branch
          %436 = sbr.rel (%p434) target = $region44
        $region43: #{tpu_custom_call.1} parent=35 // pred_region
          #allocation23 [shape = 'u32[6]{0}', space=smem, size = 0x18, scoped, tag = 'DMA stride descriptor']
          %s437 = sand.u32 %s30, 1
          %s438 = scalar_lea.sflag [#allocation8], %s437
          %s439 = sand.u32 %s97, 1
          %s440 = smul.addr %s439, 80
          %s441 = scalar_lea.vmem [#allocation7], %s440
          %s442 = smul.u32 %s38, 2
          %s443 = sadd.s32 %s442, %s39
          %s444 = smul.u32 2, %s443
          %s446 = ssub.s32 1280, 1280
          %447 = vsyncadd %s438, %s446
          %s448 = smul.addr %s37, 20
          %s449 = sadd.s32 %s444, %s448
          %s450 = smul.addr %s449, 128
          %s451 = scalar_lea.hbm %s1, %s450
          %s453 = sshll.u32 1, 14
          %s454 = sxor.u32 4294967295, %s453
          %s456 = sld [smem:[#allocation0]]
          %s457 = sadd.s32 2, %s456
          %s459 = sshll.u32 7, 26
          %s460 = sxor.u32 4294967295, %s459
          %s461 = sand.u32 0, %s460
          %s462 = sshll.u32 %s457, 26
          %s463 = sor.u32 %s461, %s462
          %s464 = sshll.u32 %s441, 4
          %s465 = int_to_ptr.vmem [resolvable:$true] %s464
          %471 = sst [smem:[#allocation23]] 512
          %s472 = scalar_lea.smem [#allocation23], 1
          %473 = sst [smem:[%s472]] 256
          %s474 = scalar_lea.smem [#allocation23], 2
          %475 = sst [smem:[%s474]] 2
          %s476 = scalar_lea.smem [#allocation23], 3
          %477 = sst [smem:[%s476]] 128
          %s478 = scalar_lea.smem [#allocation23], 4
          %479 = sst [smem:[%s478]] 128
          %s480 = scalar_lea.smem [#allocation23], 5
          %481 = sst [smem:[%s480]] 8
          %483 = dma.general %s451, 1280, %s465, %s438, [#allocation22], [#allocation23], %s463, 0
        $region44: #{tpu_custom_call.1} parent=35 // pred_fallthru
          _
        // Predicated region
        $region45: #{tpu_custom_call.1} parent=35 // pred_check
          %p484 = pneg %p139
        $region46: #{tpu_custom_call.1} parent=35 // pred_check_branch
          %486 = sbr.rel (%p484) target = $region48
        $region47: #{tpu_custom_call.1} parent=35 // pred_region
          #allocation25 [shape = 'u32[6]{0}', space=smem, size = 0x18, scoped, tag = 'DMA stride descriptor']
          %s487 = sand.u32 %s30, 1
          %s488 = scalar_lea.sflag [#allocation8], %s487
          %s489 = sand.u32 %s129, 1
          %s490 = smul.addr %s489, 320
          %s491 = scalar_lea.vmem [#allocation9], %s490
          %s492 = smul.u32 %s38, 2
          %s493 = sadd.s32 %s492, %s39
          %s494 = smul.u32 2, %s493
          %s496 = ssub.s32 5120, 5120
          %497 = vsyncadd %s488, %s496
          %s498 = smul.addr %s37, 80
          %s499 = sadd.s32 %s494, %s498
          %s500 = smul.addr %s499, 128
          %s501 = scalar_lea.hbm %s2, %s500
          %s503 = sshll.u32 1, 14
          %s504 = sxor.u32 4294967295, %s503
          %s506 = sld [smem:[#allocation0]]
          %s507 = sadd.s32 2, %s506
          %s509 = sshll.u32 7, 26
          %s510 = sxor.u32 4294967295, %s509
          %s511 = sand.u32 0, %s510
          %s512 = sshll.u32 %s507, 26
          %s513 = sor.u32 %s511, %s512
          %s514 = sshll.u32 %s491, 4
          %s515 = int_to_ptr.vmem [resolvable:$true] %s514
          %521 = sst [smem:[#allocation25]] 512
          %s522 = scalar_lea.smem [#allocation25], 1
          %523 = sst [smem:[%s522]] 256
          %s524 = scalar_lea.smem [#allocation25], 2
          %525 = sst [smem:[%s524]] 2
          %s526 = scalar_lea.smem [#allocation25], 3
          %527 = sst [smem:[%s526]] 128
          %s528 = scalar_lea.smem [#allocation25], 4
          %529 = sst [smem:[%s528]] 128
          %s530 = scalar_lea.smem [#allocation25], 5
          %531 = sst [smem:[%s530]] 8
          %533 = dma.general %s501, 5120, %s515, %s488, [#allocation24], [#allocation25], %s513, 0
        $region48: #{tpu_custom_call.1} parent=35 // pred_fallthru
          _
        // Predicated region
        $region49: #{tpu_custom_call.1} parent=35 // pred_check
          %p534 = pneg %p171
        $region50: #{tpu_custom_call.1} parent=35 // pred_check_branch
          %536 = sbr.rel (%p534) target = $region52
        $region51: #{tpu_custom_call.1} parent=35 // pred_region
          #allocation27 [shape = 'u32[6]{0}', space=smem, size = 0x18, scoped, tag = 'DMA stride descriptor']
          %s537 = sand.u32 %s161, 1
          %s538 = scalar_lea.sflag [#allocation11], %s537
          %s539 = sand.u32 %s161, 1
          %s540 = smul.addr %s539, 320
          %s541 = scalar_lea.vmem [#allocation10], %s540
          %s542 = smul.u32 %s38, 2
          %s543 = sadd.s32 %s542, %s39
          %s544 = smul.u32 2, %s543
          %s546 = ssub.s32 5120, 5120
          %547 = vsyncadd %s538, %s546
          %s548 = smul.addr %s37, 80
          %s549 = sadd.s32 %s544, %s548
          %s550 = smul.addr %s549, 128
          %s551 = scalar_lea.hbm %s3, %s550
          %s553 = sshll.u32 1, 14
          %s554 = sxor.u32 4294967295, %s553
          %s556 = sld [smem:[#allocation0]]
          %s557 = sadd.s32 2, %s556
          %s559 = sshll.u32 7, 26
          %s560 = sxor.u32 4294967295, %s559
          %s561 = sand.u32 0, %s560
          %s562 = sshll.u32 %s557, 26
          %s563 = sor.u32 %s561, %s562
          %s564 = sshll.u32 %s541, 4
          %s565 = int_to_ptr.vmem [resolvable:$true] %s564
          %571 = sst [smem:[#allocation27]] 512
          %s572 = scalar_lea.smem [#allocation27], 1
          %573 = sst [smem:[%s572]] 256
          %s574 = scalar_lea.smem [#allocation27], 2
          %575 = sst [smem:[%s574]] 2
          %s576 = scalar_lea.smem [#allocation27], 3
          %577 = sst [smem:[%s576]] 128
          %s578 = scalar_lea.smem [#allocation27], 4
          %579 = sst [smem:[%s578]] 128
          %s580 = scalar_lea.smem [#allocation27], 5
          %581 = sst [smem:[%s580]] 8
          %583 = dma.general %s551, 5120, %s565, %s538, [#allocation26], [#allocation27], %s563, 0
        $region52: #{tpu_custom_call.1} parent=35 // pred_fallthru
          _
      $region36: #{tpu_custom_call.1} parent=5 // pred_fallthru
        _
      %p584 = scmp.le.s32.totalorder 1, %s30
      %p585 = scmp.lt.s32.totalorder %s30, 5
      %p586 = pnand %p584, %p585
      %p587 = pneg %p586
      // Predicated region
      $region53: #{tpu_custom_call.1} parent=5 // pred_check
        _
      $region54: #{tpu_custom_call.1} parent=5 // pred_check_branch
        %589 = sbr.rel (%p586) target = $region56
      $region55: #{tpu_custom_call.1} parent=5 // pred_region
        %s590 = ssub.s32 %s30, 1
        %s591 = sand.u32 %s68, 1
        %s592 = scalar_lea.sflag [#allocation4], %s591
        %s593 = sand.u32 %s68, 1
        %s594 = smul.addr %s593, 80
        %s595 = scalar_lea.vmem [#allocation3], %s594
        // Predicated region
        $region57: #{tpu_custom_call.1} parent=55 // pred_check
          %p596 = pneg %p81
        $region58: #{tpu_custom_call.1} parent=55 // pred_check_branch
          %598 = sbr.rel (%p596) target = $region60
        $region59: #{tpu_custom_call.1} parent=55 // pred_region
          %599 = dma.done %s592, 1280
        $region60: #{tpu_custom_call.1} parent=55 // pred_fallthru
          _
        %s600 = sand.u32 %s35, 1
        %s601 = scalar_lea.sflag [#allocation8], %s600
        %s602 = sand.u32 %s100, 1
        %s603 = smul.addr %s602, 80
        %s604 = scalar_lea.vmem [#allocation7], %s603
        // Predicated region
        $region61: #{tpu_custom_call.1} parent=55 // pred_check
          %p605 = pneg %p113
        $region62: #{tpu_custom_call.1} parent=55 // pred_check_branch
          %607 = sbr.rel (%p605) target = $region64
        $region63: #{tpu_custom_call.1} parent=55 // pred_region
          %608 = dma.done %s601, 1280
        $region64: #{tpu_custom_call.1} parent=55 // pred_fallthru
          _
        %s609 = sand.u32 %s35, 1
        %s610 = scalar_lea.sflag [#allocation8], %s609
        %s611 = sand.u32 %s132, 1
        %s612 = smul.addr %s611, 320
        %s613 = scalar_lea.vmem [#allocation9], %s612
        // Predicated region
        $region65: #{tpu_custom_call.1} parent=55 // pred_check
          %p614 = pneg %p145
        $region66: #{tpu_custom_call.1} parent=55 // pred_check_branch
          %616 = sbr.rel (%p614) target = $region68
        $region67: #{tpu_custom_call.1} parent=55 // pred_region
          %617 = dma.done %s610, 5120
        $region68: #{tpu_custom_call.1} parent=55 // pred_fallthru
          _
        %s618 = sand.u32 %s164, 1
        %s619 = scalar_lea.sflag [#allocation11], %s618
        %s620 = sand.u32 %s164, 1
        %s621 = smul.addr %s620, 320
        %s622 = scalar_lea.vmem [#allocation10], %s621
        // Predicated region
        $region69: #{tpu_custom_call.1} parent=55 // pred_check
          %p623 = pneg %p177
        $region70: #{tpu_custom_call.1} parent=55 // pred_check_branch
          %625 = sbr.rel (%p623) target = $region72
        $region71: #{tpu_custom_call.1} parent=55 // pred_region
          %626 = dma.done %s619, 5120
        $region72: #{tpu_custom_call.1} parent=55 // pred_fallthru
          _
        // Predicated region
        $region73: #{tpu_custom_call.1} parent=55 // pred_check
          %p627 = pneg %p198
        $region74: #{tpu_custom_call.1} parent=55 // pred_check_branch
          %629 = sbr.rel (%p627) target = $region76
        $region75: #{tpu_custom_call.1} parent=55 // pred_region
          %630 = dma.done [#allocation6], 32
        $region76: #{tpu_custom_call.1} parent=55 // pred_fallthru
          _
        // Predicated region
        $region77: #{tpu_custom_call.1} parent=55 // pred_check
          %p631 = pneg %p219
        $region78: #{tpu_custom_call.1} parent=55 // pred_check_branch
          %633 = sbr.rel (%p631) target = $region80
        $region79: #{tpu_custom_call.1} parent=55 // pred_region
          %634 = dma.done [#allocation14], 32
        $region80: #{tpu_custom_call.1} parent=55 // pred_fallthru
          _
        // Predicated region
        $region81: #{tpu_custom_call.1} parent=55 // pred_check
          %p635 = pneg %p240
        $region82: #{tpu_custom_call.1} parent=55 // pred_check_branch
          %637 = sbr.rel (%p635) target = $region84
        $region83: #{tpu_custom_call.1} parent=55 // pred_region
          %638 = dma.done [#allocation14], 32
        $region84: #{tpu_custom_call.1} parent=55 // pred_fallthru
          _
        // Predicated region
        $region85: #{tpu_custom_call.1} parent=55 // pred_check
          %p639 = pneg %p261
        $region86: #{tpu_custom_call.1} parent=55 // pred_check_branch
          %641 = sbr.rel (%p639) target = $region88
        $region87: #{tpu_custom_call.1} parent=55 // pred_region
          %642 = dma.done [#allocation17], 32
        $region88: #{tpu_custom_call.1} parent=55 // pred_fallthru
          _
        // Predicated region
        $region89: #{tpu_custom_call.1} parent=55 // pred_check
          %p643 = pneg %p282
        $region90: #{tpu_custom_call.1} parent=55 // pred_check_branch
          %645 = sbr.rel (%p643) target = $region92
        $region91: #{tpu_custom_call.1} parent=55 // pred_region
          %646 = dma.done [#allocation17], 32
        $region92: #{tpu_custom_call.1} parent=55 // pred_fallthru
          _
        %647 = sfence
        %s648 = sand.u32 %s68, 1
        %s649 = scalar_lea.sflag [#allocation4], %s648
        %s650 = sand.u32 %s68, 1
        %s651 = smul.addr %s650, 80
        %s652 = scalar_lea.vmem [#allocation3], %s651
        %p653 = pneg %p81
        %p654 = pneg %p78
        %s655 = sand.u32 %s35, 1
        %s656 = scalar_lea.sflag [#allocation8], %s655
        %s657 = sand.u32 %s100, 1
        %s658 = smul.addr %s657, 80
        %s659 = scalar_lea.vmem [#allocation7], %s658
        %p660 = pneg %p113
        %p661 = pneg %p110
        %s662 = sand.u32 %s35, 1
        %s663 = scalar_lea.sflag [#allocation8], %s662
        %s664 = sand.u32 %s132, 1
        %s665 = smul.addr %s664, 320
        %s666 = scalar_lea.vmem [#allocation9], %s665
        %p667 = pneg %p145
        %p668 = pneg %p142
        %s669 = sand.u32 %s164, 1
        %s670 = scalar_lea.sflag [#allocation11], %s669
        %s671 = sand.u32 %s164, 1
        %s672 = smul.addr %s671, 320
        %s673 = scalar_lea.vmem [#allocation10], %s672
        %p674 = pneg %p177
        %p675 = pneg %p174
        %p676 = pneg %p198
        %p677 = pneg %p195
        %p678 = pneg %p219
        %p679 = pneg %p216
        %p680 = pneg %p240
        %p681 = pneg %p237
        %p682 = pneg %p261
        %p683 = pneg %p258
        %p684 = pneg %p282
        %p685 = pneg %p279
        %p686 = pneg %p310
        %p687 = pneg %p307
        %s688 = sand.u32 %s297, 1
        %s689 = scalar_lea.sflag [#allocation5], %s688
        %s690 = sand.u32 %s297, 1
        %s691 = scalar_lea.vmem [#allocation19], %s690
        %s692 = smul.u32 %s41, 2
        %s693 = sadd.s32 %s692, %s42
        %s694 = smul.u32 2, %s693
        %s695 = smul.u32 %s41, 2
        %s696 = sadd.s32 %s695, %s42
        %s697 = smul.u32 2, %s696
        %s698 = smul.u32 %s41, 2
        %s699 = sadd.s32 %s698, %s42
        %s700 = smul.u32 2, %s699
        %s701 = smul.u32 %s41, 2
        %s702 = sadd.s32 %s701, %s42
        %s703 = smul.u32 2, %s702
        %s704 = sadd.s32 %s40, %s41
        %s705 = smul.u32 %s41, 2
        %s706 = sadd.s32 %s705, %s42
        %v707 = vlaneseq
        %v708 = vand.u32 %v707, 127
        %v709 = vcvt.s32.f32 %v708
        %v710 = vlaneseq
        %v711 = vshrl.u32 %v710, 7
        %v712 = vadd.s32 %v711, 8
        %s713 = smul.u32 %s706, 16
        %v714 = vstv %s713
        %v715 = vadd.s32 %v711, %v714
        %v716 = vadd.s32 %v712, %v714
        %v717 = vcvt.s32.f32 %v715
        %v718 = vcvt.s32.f32 %v716
        %s719 = scvt.s32.f32 %s713
        %s720 = sadd.f32 %s719, 15.0
        %vm721 = vcmask 261120
        %722 = vst.msk [vmem:[#allocation2] sm:$0xff] %vm721, -1e+30
        %723 = vst.msk [vmem:[#allocation2 + $0x8] sm:$0xff] %vm721, -1e+30
        loop: start=0, step=1, limit=3
        $region93: #{tpu_custom_call.1} parent=55 // loop_pre_header
          _
        $region94: #{tpu_custom_call.1} parent=55 // loop_header
          %s725 = sphi 0, %s729
          %p726 = scmp.ge.s32.totalorder %s725, 3
        $region95: #{tpu_custom_call.1} parent=55 // loop_header_branch
          %728 = sbr.rel (%p726) target = $region99
        $region96: #{tpu_custom_call.1} parent=55 // loop_body
          %s730 = sshra.s32 %s725, 7
          %s731 = sand.u32 %s725, 127
          %s732 = sadd.s32 %s730, %s40
          %s733 = smul.u32 %s732, 128
          %s734 = sshra.s32 %s725, 7
          %s735 = sand.u32 %s725, 127
          %s736 = sadd.s32 %s733, %s735
          %s737 = sld [smem:[#allocation12 + %s736]]
          %s738 = sld [smem:[#allocation13 + %s736]]
          %s739 = sld [smem:[#allocation15 + %s736]]
          %s740 = sld [smem:[#allocation16 + %s736]]
          %s741 = sld [smem:[#allocation18 + %s736]]
          %p742 = scmp.gt.f32.partialorder %s741, 0.0
          %s743 = sadd.f32 %s738, %s739
          %p744 = scmp.ge.f32.partialorder %s743, %s719
          %p745 = pnand %p742, %p744
          %p746 = pneg %p745
          %s747 = ssub.f32 %s738, %s739
          %p748 = scmp.le.f32.partialorder %s747, %s720
          %p749 = pnand %p746, %p748
          %p750 = pneg %p749
          // Predicated region
          $region100: #{tpu_custom_call.1} parent=96 // pred_check
            _
          $region101: #{tpu_custom_call.1} parent=96 // pred_check_branch
            %752 = sbr.rel (%p749) target = $region103
          $region102: #{tpu_custom_call.1} parent=96 // pred_region
            %v753 = vstv %s737
            %v754 = vsub.f32 %v709, %v753
            %v755 = vand.u32 2147483647, %v754
            %v756 = vstv %s739
            %vm757 = vcmp.le.f32.partialorder %v755, %v756
            %v758 = vmul.f32 %v754, %v754
            %v759 = vstv %s740
            %v760 = vmul.f32 %v758, %v759
            %v761 = vsel %vm757, %v760, -1e+30
            %v762 = vstv %s738
            %v763 = vsub.f32 %v717, %v762
            %v764 = vsub.f32 %v718, %v762
            %v765 = vand.u32 2147483647, %v763
            %v766 = vand.u32 2147483647, %v764
            %vm767 = vcmp.le.f32.partialorder %v765, %v756
            %vm768 = vcmp.le.f32.partialorder %v766, %v756
            %v769 = vmul.f32 %v763, %v763
            %v770 = vmul.f32 %v764, %v764
            %v771 = vmul.f32 %v769, %v759
            %v772 = vmul.f32 %v770, %v759
            %v773 = vsel %vm767, %v771, -1e+30
            %v774 = vsel %vm768, %v772, -1e+30
            %v775 = vld [vmem:[#allocation2] sm:$0xff]
            %v776 = vld [vmem:[#allocation2 + $0x8] sm:$0xff]
            %v777 = vadd.f32 %v761, %v773
            %v778 = vadd.f32 %v761, %v774
            %v779 = vmax.f32 %v775, %v777
            %v780 = vmax.f32 %v776, %v778
            %781 = vst.msk [vmem:[#allocation2] sm:$0xff] %vm721, %v779
            %782 = vst.msk [vmem:[#allocation2 + $0x8] sm:$0xff] %vm721, %v780
          $region103: #{tpu_custom_call.1} parent=96 // pred_fallthru
            _
        $region97: #{tpu_custom_call.1} parent=55 // loop_footer
          %s729 = sadd.s32 1, %s725
        $region98: #{tpu_custom_call.1} parent=55 // loop_footer_branch
          %724 = sbr.rel target = $region94
        $region99: #{tpu_custom_call.1} parent=55 // loop_exit
          _
        %v783 = vld [vmem:[#allocation2] sm:$0xff]
        %v784 = vld [vmem:[#allocation2 + $0x8] sm:$0xff]
        %vm785 = vcmp.gt.f32.partialorder %v783, -5e+29
        %vm786 = vcmp.gt.f32.partialorder %v784, -5e+29
        %v787 = vmul.f32 %v783, 1.442695
        %v788 = vpow.pop %v787
        %v789 = vmul.f32 %v784, 1.442695
        %v790 = vpow.pop %v789
        %v791 = vsel %vm785, %v788, 0.0
        %v792 = vsel %vm786, %v790, 0.0
        %793 = vst.msk [vmem:[#allocation2] sm:$0xff] %vm721, %v791
        %794 = vst.msk [vmem:[#allocation2 + $0x8] sm:$0xff] %vm721, %v792
        %v795 = vld [vmem:[%s613] sm:$0xff]
        %v796 = vld [vmem:[%s613 + $0x8] sm:$0xff]
        %v797 = vld [vmem:[%s613 + $0x10] sm:$0xff]
        %v798 = vld [vmem:[%s613 + $0x18] sm:$0xff]
        %v799 = vld [vmem:[%s613 + $0x20] sm:$0xff]
        %v800 = vld [vmem:[%s613 + $0x28] sm:$0xff]
        %v801 = vld [vmem:[%s613 + $0x30] sm:$0xff]
        %v802 = vld [vmem:[%s613 + $0x38] sm:$0xff]
        %v803 = vld [vmem:[%s613 + $0x40] sm:$0xff]
        %v804 = vld [vmem:[%s613 + $0x48] sm:$0xff]
        %v805 = vld [vmem:[%s613 + $0x50] sm:$0xff]
        %v806 = vld [vmem:[%s613 + $0x58] sm:$0xff]
        %v807 = vld [vmem:[%s613 + $0x60] sm:$0xff]
        %v808 = vld [vmem:[%s613 + $0x68] sm:$0xff]
        %v809 = vld [vmem:[%s613 + $0x70] sm:$0xff]
        %v810 = vld [vmem:[%s613 + $0x78] sm:$0xff]
        %v811 = vld [vmem:[%s613 + $0x80] sm:$0xff]
        %v812 = vld [vmem:[%s613 + $0x88] sm:$0xff]
        %v813 = vld [vmem:[%s613 + $0x90] sm:$0xff]
        %v814 = vld [vmem:[%s613 + $0x98] sm:$0xff]
        %v815 = vld [vmem:[%s613 + $0xa0] sm:$0xff]
        %v816 = vld [vmem:[%s613 + $0xa8] sm:$0xff]
        %v817 = vld [vmem:[%s613 + $0xb0] sm:$0xff]
        %v818 = vld [vmem:[%s613 + $0xb8] sm:$0xff]
        %v819 = vld [vmem:[%s613 + $0xc0] sm:$0xff]
        %v820 = vld [vmem:[%s613 + $0xc8] sm:$0xff]
        %v821 = vld [vmem:[%s613 + $0xd0] sm:$0xff]
        %v822 = vld [vmem:[%s613 + $0xd8] sm:$0xff]
        %v823 = vld [vmem:[%s613 + $0xe0] sm:$0xff]
        %v824 = vld [vmem:[%s613 + $0xe8] sm:$0xff]
        %v825 = vld [vmem:[%s613 + $0xf0] sm:$0xff]
        %v826 = vld [vmem:[%s613 + $0xf8] sm:$0xff]
        %v827 = vld [vmem:[%s613 + $0x100] sm:$0xff]
        %v828 = vld [vmem:[%s613 + $0x108] sm:$0xff]
        %v829 = vld [vmem:[%s613 + $0x110] sm:$0xff]
        %v830 = vld [vmem:[%s613 + $0x118] sm:$0xff]
        %v831 = vld [vmem:[%s613 + $0x120] sm:$0xff]
        %v832 = vld [vmem:[%s613 + $0x128] sm:$0xff]
        %v833 = vld [vmem:[%s613 + $0x130] sm:$0xff]
        %v834 = vld [vmem:[%s613 + $0x138] sm:$0xff]
        %v835 = vld [vmem:[%s622] sm:$0xff]
        %v836 = vld [vmem:[%s622 + $0x8] sm:$0xff]
        %v837 = vld [vmem:[%s622 + $0x10] sm:$0xff]
        %v838 = vld [vmem:[%s622 + $0x18] sm:$0xff]
        %v839 = vld [vmem:[%s622 + $0x20] sm:$0xff]
        %v840 = vld [vmem:[%s622 + $0x28] sm:$0xff]
        %v841 = vld [vmem:[%s622 + $0x30] sm:$0xff]
        %v842 = vld [vmem:[%s622 + $0x38] sm:$0xff]
        %v843 = vld [vmem:[%s622 + $0x40] sm:$0xff]
        %v844 = vld [vmem:[%s622 + $0x48] sm:$0xff]
        %v845 = vld [vmem:[%s622 + $0x50] sm:$0xff]
        %v846 = vld [vmem:[%s622 + $0x58] sm:$0xff]
        %v847 = vld [vmem:[%s622 + $0x60] sm:$0xff]
        %v848 = vld [vmem:[%s622 + $0x68] sm:$0xff]
        %v849 = vld [vmem:[%s622 + $0x70] sm:$0xff]
        %v850 = vld [vmem:[%s622 + $0x78] sm:$0xff]
        %v851 = vld [vmem:[%s622 + $0x80] sm:$0xff]
        %v852 = vld [vmem:[%s622 + $0x88] sm:$0xff]
        %v853 = vld [vmem:[%s622 + $0x90] sm:$0xff]
        %v854 = vld [vmem:[%s622 + $0x98] sm:$0xff]
        %v855 = vld [vmem:[%s622 + $0xa0] sm:$0xff]
        %v856 = vld [vmem:[%s622 + $0xa8] sm:$0xff]
        %v857 = vld [vmem:[%s622 + $0xb0] sm:$0xff]
        %v858 = vld [vmem:[%s622 + $0xb8] sm:$0xff]
        %v859 = vld [vmem:[%s622 + $0xc0] sm:$0xff]
        %v860 = vld [vmem:[%s622 + $0xc8] sm:$0xff]
        %v861 = vld [vmem:[%s622 + $0xd0] sm:$0xff]
        %v862 = vld [vmem:[%s622 + $0xd8] sm:$0xff]
        %v863 = vld [vmem:[%s622 + $0xe0] sm:$0xff]
        %v864 = vld [vmem:[%s622 + $0xe8] sm:$0xff]
        %v865 = vld [vmem:[%s622 + $0xf0] sm:$0xff]
        %v866 = vld [vmem:[%s622 + $0xf8] sm:$0xff]
        %v867 = vld [vmem:[%s622 + $0x100] sm:$0xff]
        %v868 = vld [vmem:[%s622 + $0x108] sm:$0xff]
        %v869 = vld [vmem:[%s622 + $0x110] sm:$0xff]
        %v870 = vld [vmem:[%s622 + $0x118] sm:$0xff]
        %v871 = vld [vmem:[%s622 + $0x120] sm:$0xff]
        %v872 = vld [vmem:[%s622 + $0x128] sm:$0xff]
        %v873 = vld [vmem:[%s622 + $0x130] sm:$0xff]
        %v874 = vld [vmem:[%s622 + $0x138] sm:$0xff]
        %v875 = vsub.f32 %v795, %v835
        %v876 = vsub.f32 %v796, %v836
        %v877 = vsub.f32 %v797, %v837
        %v878 = vsub.f32 %v798, %v838
        %v879 = vsub.f32 %v799, %v839
        %v880 = vsub.f32 %v800, %v840
        %v881 = vsub.f32 %v801, %v841
        %v882 = vsub.f32 %v802, %v842
        %v883 = vsub.f32 %v803, %v843
        %v884 = vsub.f32 %v804, %v844
        %v885 = vsub.f32 %v805, %v845
        %v886 = vsub.f32 %v806, %v846
        %v887 = vsub.f32 %v807, %v847
        %v888 = vsub.f32 %v808, %v848
        %v889 = vsub.f32 %v809, %v849
        %v890 = vsub.f32 %v810, %v850
        %v891 = vsub.f32 %v811, %v851
        %v892 = vsub.f32 %v812, %v852
        %v893 = vsub.f32 %v813, %v853
        %v894 = vsub.f32 %v814, %v854
        %v895 = vsub.f32 %v815, %v855
        %v896 = vsub.f32 %v816, %v856
        %v897 = vsub.f32 %v817, %v857
        %v898 = vsub.f32 %v818, %v858
        %v899 = vsub.f32 %v819, %v859
        %v900 = vsub.f32 %v820, %v860
        %v901 = vsub.f32 %v821, %v861
        %v902 = vsub.f32 %v822, %v862
        %v903 = vsub.f32 %v823, %v863
        %v904 = vsub.f32 %v824, %v864
        %v905 = vsub.f32 %v825, %v865
        %v906 = vsub.f32 %v826, %v866
        %v907 = vsub.f32 %v827, %v867
        %v908 = vsub.f32 %v828, %v868
        %v909 = vsub.f32 %v829, %v869
        %v910 = vsub.f32 %v830, %v870
        %v911 = vsub.f32 %v831, %v871
        %v912 = vsub.f32 %v832, %v872
        %v913 = vsub.f32 %v833, %v873
        %v914 = vsub.f32 %v834, %v874
        %v915 = vand.u32 2147483647, %v875
        %v916 = vand.u32 2147483647, %v876
        %v917 = vand.u32 2147483647, %v877
        %v918 = vand.u32 2147483647, %v878
        %v919 = vand.u32 2147483647, %v879
        %v920 = vand.u32 2147483647, %v880
        %v921 = vand.u32 2147483647, %v881
        %v922 = vand.u32 2147483647, %v882
        %v923 = vand.u32 2147483647, %v883
        %v924 = vand.u32 2147483647, %v884
        %v925 = vand.u32 2147483647, %v885
        %v926 = vand.u32 2147483647, %v886
        %v927 = vand.u32 2147483647, %v887
        %v928 = vand.u32 2147483647, %v888
        %v929 = vand.u32 2147483647, %v889
        %v930 = vand.u32 2147483647, %v890
        %v931 = vand.u32 2147483647, %v891
        %v932 = vand.u32 2147483647, %v892
        %v933 = vand.u32 2147483647, %v893
        %v934 = vand.u32 2147483647, %v894
        %v935 = vand.u32 2147483647, %v895
        %v936 = vand.u32 2147483647, %v896
        %v937 = vand.u32 2147483647, %v897
        %v938 = vand.u32 2147483647, %v898
        %v939 = vand.u32 2147483647, %v899
        %v940 = vand.u32 2147483647, %v900
        %v941 = vand.u32 2147483647, %v901
        %v942 = vand.u32 2147483647, %v902
        %v943 = vand.u32 2147483647, %v903
        %v944 = vand.u32 2147483647, %v904
        %v945 = vand.u32 2147483647, %v905
        %v946 = vand.u32 2147483647, %v906
        %v947 = vand.u32 2147483647, %v907
        %v948 = vand.u32 2147483647, %v908
        %v949 = vand.u32 2147483647, %v909
        %v950 = vand.u32 2147483647, %v910
        %v951 = vand.u32 2147483647, %v911
        %v952 = vand.u32 2147483647, %v912
        %v953 = vand.u32 2147483647, %v913
        %v954 = vand.u32 2147483647, %v914
        %vm955 = vcmp.lt.f32.partialorder %v915, 1.0
        %vm956 = vcmp.lt.f32.partialorder %v916, 1.0
        %vm957 = vcmp.lt.f32.partialorder %v917, 1.0
        %vm958 = vcmp.lt.f32.partialorder %v918, 1.0
        %vm959 = vcmp.lt.f32.partialorder %v919, 1.0
        %vm960 = vcmp.lt.f32.partialorder %v920, 1.0
        %vm961 = vcmp.lt.f32.partialorder %v921, 1.0
        %vm962 = vcmp.lt.f32.partialorder %v922, 1.0
        %vm963 = vcmp.lt.f32.partialorder %v923, 1.0
        %vm964 = vcmp.lt.f32.partialorder %v924, 1.0
        %vm965 = vcmp.lt.f32.partialorder %v925, 1.0
        %vm966 = vcmp.lt.f32.partialorder %v926, 1.0
        %vm967 = vcmp.lt.f32.partialorder %v927, 1.0
        %vm968 = vcmp.lt.f32.partialorder %v928, 1.0
        %vm969 = vcmp.lt.f32.partialorder %v929, 1.0
        %vm970 = vcmp.lt.f32.partialorder %v930, 1.0
        %vm971 = vcmp.lt.f32.partialorder %v931, 1.0
        %vm972 = vcmp.lt.f32.partialorder %v932, 1.0
        %vm973 = vcmp.lt.f32.partialorder %v933, 1.0
        %vm974 = vcmp.lt.f32.partialorder %v934, 1.0
        %vm975 = vcmp.lt.f32.partialorder %v935, 1.0
        %vm976 = vcmp.lt.f32.partialorder %v936, 1.0
        %vm977 = vcmp.lt.f32.partialorder %v937, 1.0
        %vm978 = vcmp.lt.f32.partialorder %v938, 1.0
        %vm979 = vcmp.lt.f32.partialorder %v939, 1.0
        %vm980 = vcmp.lt.f32.partialorder %v940, 1.0
        %vm981 = vcmp.lt.f32.partialorder %v941, 1.0
        %vm982 = vcmp.lt.f32.partialorder %v942, 1.0
        %vm983 = vcmp.lt.f32.partialorder %v943, 1.0
        %vm984 = vcmp.lt.f32.partialorder %v944, 1.0
        %vm985 = vcmp.lt.f32.partialorder %v945, 1.0
        %vm986 = vcmp.lt.f32.partialorder %v946, 1.0
        %vm987 = vcmp.lt.f32.partialorder %v947, 1.0
        %vm988 = vcmp.lt.f32.partialorder %v948, 1.0
        %vm989 = vcmp.lt.f32.partialorder %v949, 1.0
        %vm990 = vcmp.lt.f32.partialorder %v950, 1.0
        %vm991 = vcmp.lt.f32.partialorder %v951, 1.0
        %vm992 = vcmp.lt.f32.partialorder %v952, 1.0
        %vm993 = vcmp.lt.f32.partialorder %v953, 1.0
        %vm994 = vcmp.lt.f32.partialorder %v954, 1.0
        %v995 = vmul.f32 %v875, 0.5
        %v996 = vmul.f32 %v876, 0.5
        %v997 = vmul.f32 %v877, 0.5
        %v998 = vmul.f32 %v878, 0.5
        %v999 = vmul.f32 %v879, 0.5
        %v1000 = vmul.f32 %v880, 0.5
        %v1001 = vmul.f32 %v881, 0.5
        %v1002 = vmul.f32 %v882, 0.5
        %v1003 = vmul.f32 %v883, 0.5
        %v1004 = vmul.f32 %v884, 0.5
        %v1005 = vmul.f32 %v885, 0.5
        %v1006 = vmul.f32 %v886, 0.5
        %v1007 = vmul.f32 %v887, 0.5
        %v1008 = vmul.f32 %v888, 0.5
        %v1009 = vmul.f32 %v889, 0.5
        %v1010 = vmul.f32 %v890, 0.5
        %v1011 = vmul.f32 %v891, 0.5
        %v1012 = vmul.f32 %v892, 0.5
        %v1013 = vmul.f32 %v893, 0.5
        %v1014 = vmul.f32 %v894, 0.5
        %v1015 = vmul.f32 %v895, 0.5
        %v1016 = vmul.f32 %v896, 0.5
        %v1017 = vmul.f32 %v897, 0.5
        %v1018 = vmul.f32 %v898, 0.5
        %v1019 = vmul.f32 %v899, 0.5
        %v1020 = vmul.f32 %v900, 0.5
        %v1021 = vmul.f32 %v901, 0.5
        %v1022 = vmul.f32 %v902, 0.5
        %v1023 = vmul.f32 %v903, 0.5
        %v1024 = vmul.f32 %v904, 0.5
        %v1025 = vmul.f32 %v905, 0.5
        %v1026 = vmul.f32 %v906, 0.5
        %v1027 = vmul.f32 %v907, 0.5
        %v1028 = vmul.f32 %v908, 0.5
        %v1029 = vmul.f32 %v909, 0.5
        %v1030 = vmul.f32 %v910, 0.5
        %v1031 = vmul.f32 %v911, 0.5
        %v1032 = vmul.f32 %v912, 0.5
        %v1033 = vmul.f32 %v913, 0.5
        %v1034 = vmul.f32 %v914, 0.5
        %v1035 = vmul.f32 %v995, %v875
        %v1036 = vmul.f32 %v996, %v876
        %v1037 = vmul.f32 %v997, %v877
        %v1038 = vmul.f32 %v998, %v878
        %v1039 = vmul.f32 %v999, %v879
        %v1040 = vmul.f32 %v1000, %v880
        %v1041 = vmul.f32 %v1001, %v881
        %v1042 = vmul.f32 %v1002, %v882
        %v1043 = vmul.f32 %v1003, %v883
        %v1044 = vmul.f32 %v1004, %v884
        %v1045 = vmul.f32 %v1005, %v885
        %v1046 = vmul.f32 %v1006, %v886
        %v1047 = vmul.f32 %v1007, %v887
        %v1048 = vmul.f32 %v1008, %v888
        %v1049 = vmul.f32 %v1009, %v889
        %v1050 = vmul.f32 %v1010, %v890
        %v1051 = vmul.f32 %v1011, %v891
        %v1052 = vmul.f32 %v1012, %v892
        %v1053 = vmul.f32 %v1013, %v893
        %v1054 = vmul.f32 %v1014, %v894
        %v1055 = vmul.f32 %v1015, %v895
        %v1056 = vmul.f32 %v1016, %v896
        %v1057 = vmul.f32 %v1017, %v897
        %v1058 = vmul.f32 %v1018, %v898
        %v1059 = vmul.f32 %v1019, %v899
        %v1060 = vmul.f32 %v1020, %v900
        %v1061 = vmul.f32 %v1021, %v901
        %v1062 = vmul.f32 %v1022, %v902
        %v1063 = vmul.f32 %v1023, %v903
        %v1064 = vmul.f32 %v1024, %v904
        %v1065 = vmul.f32 %v1025, %v905
        %v1066 = vmul.f32 %v1026, %v906
        %v1067 = vmul.f32 %v1027, %v907
        %v1068 = vmul.f32 %v1028, %v908
        %v1069 = vmul.f32 %v1029, %v909
        %v1070 = vmul.f32 %v1030, %v910
        %v1071 = vmul.f32 %v1031, %v911
        %v1072 = vmul.f32 %v1032, %v912
        %v1073 = vmul.f32 %v1033, %v913
        %v1074 = vmul.f32 %v1034, %v914
        %v1075 = vsub.f32 %v915, 0.5
        %v1076 = vsub.f32 %v916, 0.5
        %v1077 = vsub.f32 %v917, 0.5
        %v1078 = vsub.f32 %v918, 0.5
        %v1079 = vsub.f32 %v919, 0.5
        %v1080 = vsub.f32 %v920, 0.5
        %v1081 = vsub.f32 %v921, 0.5
        %v1082 = vsub.f32 %v922, 0.5
        %v1083 = vsub.f32 %v923, 0.5
        %v1084 = vsub.f32 %v924, 0.5
        %v1085 = vsub.f32 %v925, 0.5
        %v1086 = vsub.f32 %v926, 0.5
        %v1087 = vsub.f32 %v927, 0.5
        %v1088 = vsub.f32 %v928, 0.5
        %v1089 = vsub.f32 %v929, 0.5
        %v1090 = vsub.f32 %v930, 0.5
        %v1091 = vsub.f32 %v931, 0.5
        %v1092 = vsub.f32 %v932, 0.5
        %v1093 = vsub.f32 %v933, 0.5
        %v1094 = vsub.f32 %v934, 0.5
        %v1095 = vsub.f32 %v935, 0.5
        %v1096 = vsub.f32 %v936, 0.5
        %v1097 = vsub.f32 %v937, 0.5
        %v1098 = vsub.f32 %v938, 0.5
        %v1099 = vsub.f32 %v939, 0.5
        %v1100 = vsub.f32 %v940, 0.5
        %v1101 = vsub.f32 %v941, 0.5
        %v1102 = vsub.f32 %v942, 0.5
        %v1103 = vsub.f32 %v943, 0.5
        %v1104 = vsub.f32 %v944, 0.5
        %v1105 = vsub.f32 %v945, 0.5
        %v1106 = vsub.f32 %v946, 0.5
        %v1107 = vsub.f32 %v947, 0.5
        %v1108 = vsub.f32 %v948, 0.5
        %v1109 = vsub.f32 %v949, 0.5
        %v1110 = vsub.f32 %v950, 0.5
        %v1111 = vsub.f32 %v951, 0.5
        %v1112 = vsub.f32 %v952, 0.5
        %v1113 = vsub.f32 %v953, 0.5
        %v1114 = vsub.f32 %v954, 0.5
        %v1115 = vsel %vm955, %v1035, %v1075
        %v1116 = vsel %vm956, %v1036, %v1076
        %v1117 = vsel %vm957, %v1037, %v1077
        %v1118 = vsel %vm958, %v1038, %v1078
        %v1119 = vsel %vm959, %v1039, %v1079
        %v1120 = vsel %vm960, %v1040, %v1080
        %v1121 = vsel %vm961, %v1041, %v1081
        %v1122 = vsel %vm962, %v1042, %v1082
        %v1123 = vsel %vm963, %v1043, %v1083
        %v1124 = vsel %vm964, %v1044, %v1084
        %v1125 = vsel %vm965, %v1045, %v1085
        %v1126 = vsel %vm966, %v1046, %v1086
        %v1127 = vsel %vm967, %v1047, %v1087
        %v1128 = vsel %vm968, %v1048, %v1088
        %v1129 = vsel %vm969, %v1049, %v1089
        %v1130 = vsel %vm970, %v1050, %v1090
        %v1131 = vsel %vm971, %v1051, %v1091
        %v1132 = vsel %vm972, %v1052, %v1092
        %v1133 = vsel %vm973, %v1053, %v1093
        %v1134 = vsel %vm974, %v1054, %v1094
        %v1135 = vsel %vm975, %v1055, %v1095
        %v1136 = vsel %vm976, %v1056, %v1096
        %v1137 = vsel %vm977, %v1057, %v1097
        %v1138 = vsel %vm978, %v1058, %v1098
        %v1139 = vsel %vm979, %v1059, %v1099
        %v1140 = vsel %vm980, %v1060, %v1100
        %v1141 = vsel %vm981, %v1061, %v1101
        %v1142 = vsel %vm982, %v1062, %v1102
        %v1143 = vsel %vm983, %v1063, %v1103
        %v1144 = vsel %vm984, %v1064, %v1104
        %v1145 = vsel %vm985, %v1065, %v1105
        %v1146 = vsel %vm986, %v1066, %v1106
        %v1147 = vsel %vm987, %v1067, %v1107
        %v1148 = vsel %vm988, %v1068, %v1108
        %v1149 = vsel %vm989, %v1069, %v1109
        %v1150 = vsel %vm990, %v1070, %v1110
        %v1151 = vsel %vm991, %v1071, %v1111
        %v1152 = vsel %vm992, %v1072, %v1112
        %v1153 = vsel %vm993, %v1073, %v1113
        %v1154 = vsel %vm994, %v1074, %v1114
        %v1155 = vsel %vm721, %v1115, 0.0
        %v1156 = vsel %vm721, %v1117, 0.0
        %v1157 = vadd.f32 %v1155, %v1156
        %v1158 = vsel %vm721, %v1119, 0.0
        %v1159 = vadd.f32 %v1157, %v1158
        %v1160 = vsel %vm721, %v1121, 0.0
        %v1161 = vadd.f32 %v1159, %v1160
        %v1162 = vsel %vm721, %v1123, 0.0
        %v1163 = vadd.f32 %v1161, %v1162
        %v1164 = vsel %vm721, %v1125, 0.0
        %v1165 = vadd.f32 %v1163, %v1164
        %v1166 = vsel %vm721, %v1127, 0.0
        %v1167 = vadd.f32 %v1165, %v1166
        %v1168 = vsel %vm721, %v1129, 0.0
        %v1169 = vadd.f32 %v1167, %v1168
        %v1170 = vsel %vm721, %v1131, 0.0
        %v1171 = vadd.f32 %v1169, %v1170
        %v1172 = vsel %vm721, %v1133, 0.0
        %v1173 = vadd.f32 %v1171, %v1172
        %v1174 = vsel %vm721, %v1135, 0.0
        %v1175 = vadd.f32 %v1173, %v1174
        %v1176 = vsel %vm721, %v1137, 0.0
        %v1177 = vadd.f32 %v1175, %v1176
        %v1178 = vsel %vm721, %v1139, 0.0
        %v1179 = vadd.f32 %v1177, %v1178
        %v1180 = vsel %vm721, %v1141, 0.0
        %v1181 = vadd.f32 %v1179, %v1180
        %v1182 = vsel %vm721, %v1143, 0.0
        %v1183 = vadd.f32 %v1181, %v1182
        %v1184 = vsel %vm721, %v1145, 0.0
        %v1185 = vadd.f32 %v1183, %v1184
        %v1186 = vsel %vm721, %v1147, 0.0
        %v1187 = vadd.f32 %v1185, %v1186
        %v1188 = vsel %vm721, %v1149, 0.0
        %v1189 = vadd.f32 %v1187, %v1188
        %v1190 = vsel %vm721, %v1151, 0.0
        %v1191 = vadd.f32 %v1189, %v1190
        %v1192 = vsel %vm721, %v1153, 0.0
        %v1193 = vadd.f32 %v1191, %v1192
        %v1194 = vsel %vm721, %v1116, 0.0
        %v1195 = vsel %vm721, %v1118, 0.0
        %v1196 = vadd.f32 %v1194, %v1195
        %v1197 = vsel %vm721, %v1120, 0.0
        %v1198 = vadd.f32 %v1196, %v1197
        %v1199 = vsel %vm721, %v1122, 0.0
        %v1200 = vadd.f32 %v1198, %v1199
        %v1201 = vsel %vm721, %v1124, 0.0
        %v1202 = vadd.f32 %v1200, %v1201
        %v1203 = vsel %vm721, %v1126, 0.0
        %v1204 = vadd.f32 %v1202, %v1203
        %v1205 = vsel %vm721, %v1128, 0.0
        %v1206 = vadd.f32 %v1204, %v1205
        %v1207 = vsel %vm721, %v1130, 0.0
        %v1208 = vadd.f32 %v1206, %v1207
        %v1209 = vsel %vm721, %v1132, 0.0
        %v1210 = vadd.f32 %v1208, %v1209
        %v1211 = vsel %vm721, %v1134, 0.0
        %v1212 = vadd.f32 %v1210, %v1211
        %v1213 = vsel %vm721, %v1136, 0.0
        %v1214 = vadd.f32 %v1212, %v1213
        %v1215 = vsel %vm721, %v1138, 0.0
        %v1216 = vadd.f32 %v1214, %v1215
        %v1217 = vsel %vm721, %v1140, 0.0
        %v1218 = vadd.f32 %v1216, %v1217
        %v1219 = vsel %vm721, %v1142, 0.0
        %v1220 = vadd.f32 %v1218, %v1219
        %v1221 = vsel %vm721, %v1144, 0.0
        %v1222 = vadd.f32 %v1220, %v1221
        %v1223 = vsel %vm721, %v1146, 0.0
        %v1224 = vadd.f32 %v1222, %v1223
        %v1225 = vsel %vm721, %v1148, 0.0
        %v1226 = vadd.f32 %v1224, %v1225
        %v1227 = vsel %vm721, %v1150, 0.0
        %v1228 = vadd.f32 %v1226, %v1227
        %v1229 = vsel %vm721, %v1152, 0.0
        %v1230 = vadd.f32 %v1228, %v1229
        %v1231 = vsel %vm721, %v1154, 0.0
        %v1232 = vadd.f32 %v1230, %v1231
        %v1233 = vrcp.pop 20.0
        %v1234 = vmul.f32 %v1193, %v1233
        %v1235 = vmul.f32 %v1232, %v1233
        %v1236 = vld [vmem:[#allocation2] sm:$0xff]
        %v1237 = vld [vmem:[#allocation2 + $0x8] sm:$0xff]
        %v1238 = vmul.f32 %v1234, %v1236
        %v1239 = vmul.f32 %v1235, %v1237
        %v1240 = vsel %vm721, %v1238, 0.0
        %v1241 = vsel %vm721, %v1239, 0.0
        %v1242 = vadd.f32 %v1240, %v1241
        %1243 = vadd.xlane.f32.xlu0 %v1242
        %v1244 = vpop.xlane.xlu0 %1243
        %v1245 = vrot.slane %v1244, 4
        %v1246 = vadd.f32 %v1244, %v1245
        %v1247 = vrot.slane %v1246, 2
        %v1248 = vadd.f32 %v1246, %v1247
        %v1249 = vrot.slane %v1248, 1
        %v1250 = vadd.f32 %v1248, %v1249
        %s1251 = vtos %v1250
        %v1252 = vld [vmem:[%s595] sm:$0xff]
        %v1253 = vld [vmem:[%s595 + $0x8] sm:$0xff]
        %v1254 = vld [vmem:[%s595 + $0x10] sm:$0xff]
        %v1255 = vld [vmem:[%s595 + $0x18] sm:$0xff]
        %v1256 = vld [vmem:[%s595 + $0x20] sm:$0xff]
        %v1257 = vld [vmem:[%s595 + $0x28] sm:$0xff]
        %v1258 = vld [vmem:[%s595 + $0x30] sm:$0xff]
        %v1259 = vld [vmem:[%s595 + $0x38] sm:$0xff]
        %v1260 = vld [vmem:[%s595 + $0x40] sm:$0xff]
        %v1261 = vld [vmem:[%s595 + $0x48] sm:$0xff]
        %v1262 = vsel %vm721, %v1252, -inf
        %v1263 = vsel %vm721, %v1254, -inf
        %v1264 = vsel %vm721, %v1256, -inf
        %v1265 = vmax.f32 %v1262, %v1264
        %v1266 = vsel %vm721, %v1258, -inf
        %v1267 = vmax.f32 %v1263, %v1266
        %v1268 = vsel %vm721, %v1260, -inf
        %v1269 = vmax.f32 %v1265, %v1268
        %v1270 = vmax.f32 %v1269, %v1267
        %v1271 = vsel %vm721, %v1253, -inf
        %v1272 = vsel %vm721, %v1255, -inf
        %v1273 = vsel %vm721, %v1257, -inf
        %v1274 = vmax.f32 %v1271, %v1273
        %v1275 = vsel %vm721, %v1259, -inf
        %v1276 = vmax.f32 %v1272, %v1275
        %v1277 = vsel %vm721, %v1261, -inf
        %v1278 = vmax.f32 %v1274, %v1277
        %v1279 = vmax.f32 %v1278, %v1276
        %v1280 = vld [vmem:[%s604] sm:$0xff]
        %v1281 = vld [vmem:[%s604 + $0x8] sm:$0xff]
        %v1282 = vld [vmem:[%s604 + $0x10] sm:$0xff]
        %v1283 = vld [vmem:[%s604 + $0x18] sm:$0xff]
        %v1284 = vld [vmem:[%s604 + $0x20] sm:$0xff]
        %v1285 = vld [vmem:[%s604 + $0x28] sm:$0xff]
        %v1286 = vld [vmem:[%s604 + $0x30] sm:$0xff]
        %v1287 = vld [vmem:[%s604 + $0x38] sm:$0xff]
        %v1288 = vld [vmem:[%s604 + $0x40] sm:$0xff]
        %v1289 = vld [vmem:[%s604 + $0x48] sm:$0xff]
        %v1290 = vsel %vm721, %v1280, -inf
        %v1291 = vsel %vm721, %v1282, -inf
        %v1292 = vsel %vm721, %v1284, -inf
        %v1293 = vmax.f32 %v1290, %v1292
        %v1294 = vsel %vm721, %v1286, -inf
        %v1295 = vmax.f32 %v1291, %v1294
        %v1296 = vsel %vm721, %v1288, -inf
        %v1297 = vmax.f32 %v1293, %v1296
        %v1298 = vmax.f32 %v1297, %v1295
        %v1299 = vsel %vm721, %v1281, -inf
        %v1300 = vsel %vm721, %v1283, -inf
        %v1301 = vsel %vm721, %v1285, -inf
        %v1302 = vmax.f32 %v1299, %v1301
        %v1303 = vsel %vm721, %v1287, -inf
        %v1304 = vmax.f32 %v1300, %v1303
        %v1305 = vsel %vm721, %v1289, -inf
        %v1306 = vmax.f32 %v1302, %v1305
        %v1307 = vmax.f32 %v1306, %v1304
        %v1308 = vmul.f32 %v1298, 0.5
        %v1309 = vmul.f32 %v1307, 0.5
        %v1310 = vxor.u32 %v1308, 2147483648
        %v1311 = vxor.u32 %v1309, 2147483648
        %v1312 = vmul.f32 %v1310, 1.442695
        %v1313 = vpow.pop %v1312
        %v1314 = vmul.f32 %v1311, 1.442695
        %v1315 = vpow.pop %v1314
        %v1316 = vadd.f32 %v1313, 1.0
        %v1317 = vadd.f32 %v1315, 1.0
        %v1318 = vrcp.pop %v1316
        %v1319 = vmul.f32 1.0, %v1318
        %v1320 = vrcp.pop %v1317
        %v1321 = vmul.f32 1.0, %v1320
        %v1322 = vsub.f32 %v1270, %v1319
        %v1323 = vsub.f32 %v1279, %v1321
        %v1324 = vand.u32 2147483647, %v1322
        %v1325 = vand.u32 2147483647, %v1323
        %v1326 = vmul.f32 %v1324, %v1236
        %v1327 = vmul.f32 %v1325, %v1237
        %v1328 = vsel %vm721, %v1326, 0.0
        %v1329 = vsel %vm721, %v1327, 0.0
        %v1330 = vadd.f32 %v1328, %v1329
        %1331 = vadd.xlane.f32.xlu0 %v1330
        %v1332 = vpop.xlane.xlu0 %1331
        %v1333 = vrot.slane %v1332, 4
        %v1334 = vadd.f32 %v1332, %v1333
        %v1335 = vrot.slane %v1334, 2
        %v1336 = vadd.f32 %v1334, %v1335
        %v1337 = vrot.slane %v1336, 1
        %v1338 = vadd.f32 %v1336, %v1337
        %s1339 = vtos %v1338
        %v1340 = vsel %vm721, %v1236, 0.0
        %v1341 = vsel %vm721, %v1237, 0.0
        %v1342 = vadd.f32 %v1340, %v1341
        %1343 = vadd.xlane.f32.xlu0 %v1342
        %v1344 = vpop.xlane.xlu0 %1343
        %v1345 = vrot.slane %v1344, 4
        %v1346 = vadd.f32 %v1344, %v1345
        %v1347 = vrot.slane %v1346, 2
        %v1348 = vadd.f32 %v1346, %v1347
        %v1349 = vrot.slane %v1348, 1
        %v1350 = vadd.f32 %v1348, %v1349
        %s1351 = vtos %v1350
        %vm1352 = vcmp.eq.s32.totalorder %v708, 0
        %vm1353 = vcmp.eq.s32.totalorder %v708, 1
        %vm1354 = vcmp.eq.s32.totalorder %v708, 2
        %v1355 = vstv %s1351
        %v1356 = vsel %vm1354, %v1355, 0.0
        %v1357 = vstv %s1339
        %v1358 = vsel %vm1353, %v1357, %v1356
        %v1359 = vstv %s1251
        %v1360 = vsel %vm1352, %v1359, %v1358
        %p1361 = scmp.eq.s32.totalorder %s42, 0
        // Predicated region
        $region104: #{tpu_custom_call.1} parent=55 // pred_check
          %p1362 = pneg %p1361
        $region105: #{tpu_custom_call.1} parent=55 // pred_check_branch
          %1364 = sbr.rel (%p1362) target = $region107
        $region106: #{tpu_custom_call.1} parent=55 // pred_region
          %1365 = vst [vmem:[%s691] sm:$0x1] 0.0
        $region107: #{tpu_custom_call.1} parent=55 // pred_fallthru
          _
        %v1366 = vld [vmem:[%s691] sm:$0x1]
        %v1367 = vadd.f32 %v1366, %v1360
        %1368 = vst [vmem:[%s691] sm:$0x1] %v1367
        %s1369 = sand.u32 %s297, 1
        %s1370 = scalar_lea.sflag [#allocation5], %s1369
        %s1371 = sand.u32 %s297, 1
        %s1372 = scalar_lea.vmem [#allocation19], %s1371
        // Predicated region
        $region108: #{tpu_custom_call.1} parent=55 // pred_check
          %p1373 = pneg %p307
        $region109: #{tpu_custom_call.1} parent=55 // pred_check_branch
          %1375 = sbr.rel (%p1373) target = $region111
        $region110: #{tpu_custom_call.1} parent=55 // pred_region
          %s1376 = sadd.s32 %s40, %s41
          %s1378 = ssub.s32 16, 16
          %1379 = vsyncadd %s1370, %s1378
          %s1380 = smul.addr %s1376, 16
          %s1381 = scalar_lea.hbm %s9, %s1380
          %s1383 = sshll.u32 %s1372, 4
          %s1384 = int_to_ptr.vmem [resolvable:$true] %s1383
          %1386 = dma.vmem_to_hbm [thread:$0]  %s1384, 16, %s1381, %s1370
        $region111: #{tpu_custom_call.1} parent=55 // pred_fallthru
          _
      $region56: #{tpu_custom_call.1} parent=5 // pred_fallthru
        _
      %p1387 = scmp.le.s32.totalorder 2, %s30
      // Predicated region
      $region112: #{tpu_custom_call.1} parent=5 // pred_check
        %p1388 = pneg %p1387
      $region113: #{tpu_custom_call.1} parent=5 // pred_check_branch
        %1390 = sbr.rel (%p1388) target = $region115
      $region114: #{tpu_custom_call.1} parent=5 // pred_region
        %s1391 = ssub.s32 %s30, 2
        // Predicated region
        $region116: #{tpu_custom_call.1} parent=114 // pred_check
          %p1392 = pneg %p313
        $region117: #{tpu_custom_call.1} parent=114 // pred_check_branch
          %1394 = sbr.rel (%p1392) target = $region119
        $region118: #{tpu_custom_call.1} parent=114 // pred_region
          %s1395 = sand.u32 %s298, 1
          %s1396 = scalar_lea.sflag [#allocation5], %s1395
          %s1397 = sand.u32 %s298, 1
          %s1398 = scalar_lea.vmem [#allocation19], %s1397
          %1399 = dma.done %s1396, 16
        $region119: #{tpu_custom_call.1} parent=114 // pred_fallthru
          _
      $region115: #{tpu_custom_call.1} parent=5 // pred_fallthru
        _
    $region6: #{tpu_custom_call.1} parent=1 // loop_footer
      %s34 = sadd.s32 1, %s30
    $region7: #{tpu_custom_call.1} parent=1 // loop_footer_branch
      %29 = sbr.rel target = $region3
    $region8: #{tpu_custom_call.1} parent=1 // loop_exit
      _
    %1400 = vsyncpa [#allocation4], 1
    %s1401 = scalar_lea.sflag [#allocation4], 1
    %1402 = vsyncpa %s1401, 1
    %1403 = vsyncpa [#allocation8], 1
    %s1404 = scalar_lea.sflag [#allocation8], 1
    %1405 = vsyncpa %s1404, 1
    %1406 = vsyncpa [#allocation11], 1
    %s1407 = scalar_lea.sflag [#allocation11], 1
    %1408 = vsyncpa %s1407, 1
    %1409 = vsyncpa [#allocation5], 1
    %s1410 = scalar_lea.sflag [#allocation5], 1
    %1411 = vsyncpa %s1410, 1
    %1412 = vsyncpa [#allocation6], 1
    %s1413 = scalar_lea.sflag [#allocation6], 1
    %1414 = vsyncpa %s1413, 1
    %1415 = vsyncpa [#allocation14], 1
    %1416 = vsyncpa [#allocation17], 1

</llo_original>
